<compile_context>
chip_gen: v5e
topology: v5e:2x2
jax: 0.10.0
libtpu: 0.0.40
codegen_flags: <defaults>
</compile_context>

<pallas_src>
import jax
import jax.numpy as jnp
from jax import lax
from jax.experimental import pallas as pl
from jax.experimental.pallas import tpu as pltpu

LN_EPS = 1e-5  # PyTorch nn.LayerNorm default


def _detect_vmem_limit():
    """Generation-aware VMEM budget with >8 MiB headroom for Mosaic scratch."""
    try:
        cap = int(pltpu.get_tpu_info().vmem_capacity_bytes)
    except Exception:
        cap = 64 * 1024 * 1024  # conservative (v7x-sized) fallback
    return max(cap - 16 * 1024 * 1024, 32 * 1024 * 1024)


_VMEM_LIMIT = _detect_vmem_limit()
_BIG_VMEM = _VMEM_LIMIT >= 96 * 1024 * 1024  # v5e / v6e (128 MiB physical)


def _pick_tile(n, candidates):
    for c in candidates:
        if n % c == 0:
            return c
    return n


def _layernorm(x, w, b):
    mu = jnp.mean(x, axis=-1, keepdims=True)
    var = jnp.mean((x - mu) ** 2, axis=-1, keepdims=True)
    return (x - mu) * lax.rsqrt(var + LN_EPS) * w + b


# ---------------------------------------------------------------------------
# One transformer block.
# Grid = (B, T // TILE_T); T axis is 'arbitrary' (sequential).  At t == 0 the
# whole-sequence ln1(x) is projected with three lane-dense (T,C)@(C,C) matmuls
# and split per head into (H, T, hd) bf16 scratch (Q pre-scaled by 1/sqrt(hd)).
# Each query tile then runs a causal flash loop over key tiles [0, t].
# Weight BlockSpecs use constant index maps, so they are DMA'd once.
# ---------------------------------------------------------------------------
def block_kernel(x_full_ref, x_tile_ref,
                 ln1_w_ref, ln1_b_ref,
                 wq_ref, bq_ref, wk_ref, bk_ref, wv_ref, bv_ref,
                 wproj_ref, bproj_ref,
                 ln2_w_ref, ln2_b_ref,
                 wfc_ref, bfc_ref, wout_ref, bout_ref,
                 o_ref, q_sc, k_sc, v_sc):
    t = pl.program_id(1)
    T = x_full_ref.shape[1]
    C = x_full_ref.shape[2]
    n_head, _, hd = q_sc.shape
    tile_t = o_ref.shape[1]
    scale = 1.0 / (hd ** 0.5)

    # ---- once per batch element: full-sequence Q/K/V into scratch ----------
    @pl.when(t == 0)
    def _():
        h = _layernorm(x_full_ref[0], ln1_w_ref[0], ln1_b_ref[0]).astype(jnp.bfloat16)
        # Lane-dense N=C projections (full MXU width), f32 accumulation.
        q = (jnp.dot(h, wq_ref[...], preferred_element_type=jnp.float32)
             + bq_ref[0]) * scale              # fold 1/sqrt(hd) into Q once
        k = jnp.dot(h, wk_ref[...], preferred_element_type=jnp.float32) + bk_ref[0]
        v = jnp.dot(h, wv_ref[...], preferred_element_type=jnp.float32) + bv_ref[0]
        # Split heads with static lane slices (no reshape of the lane dim).
        for hh in range(n_head):
            sl = slice(hh * hd, (hh + 1) * hd)
            q_sc[hh] = q[:, sl].astype(jnp.bfloat16)
            k_sc[hh] = k[:, sl].astype(jnp.bfloat16)
            v_sc[hh] = v[:, sl].astype(jnp.bfloat16)

    # ---- attention for this query tile: flash loop over key tiles [0, t] ---
    start = pl.multiple_of(t * tile_t, tile_t)
    q_t = q_sc[:, pl.ds(start, tile_t), :]                      # (H, TT, hd) bf16

    row = lax.broadcasted_iota(jnp.int32, (tile_t, tile_t), 0)
    col = lax.broadcasted_iota(jnp.int32, (tile_t, tile_t), 1)
    tri = col <= row                                            # diagonal-tile mask

    def kv_step(kv, carry):
        m, l, acc = carry
        koff = pl.multiple_of(kv * tile_t, tile_t)
        k_blk = k_sc[:, pl.ds(koff, tile_t), :]                 # (H, TT, hd)
        v_blk = v_sc[:, pl.ds(koff, tile_t), :]
        s = jnp.einsum('htd,hsd->hts', q_t, k_blk,
                       preferred_element_type=jnp.float32)      # (H, TT, TT)
        keep = jnp.logical_or(kv < t, tri)                      # mask only diag tile
        s = jnp.where(keep[None], s, -1e30)
        m_new = jnp.maximum(m, s.max(-1, keepdims=True))
        alpha = jnp.exp(m - m_new)
        p = jnp.exp(s - m_new)                                  # unnormalized probs
        l_new = alpha * l + p.sum(-1, keepdims=True)
        acc_new = alpha * acc + jnp.einsum(
            'hts,hsd->htd', p.astype(jnp.bfloat16), v_blk,
            preferred_element_type=jnp.float32)
        return m_new, l_new, acc_new

    m0 = jnp.full((n_head, tile_t, 1), -1e30, jnp.float32)
    l0 = jnp.zeros((n_head, tile_t, 1), jnp.float32)
    a0 = jnp.zeros((n_head, tile_t, hd), jnp.float32)
    _, l_f, acc_f = lax.fori_loop(0, t + 1, kv_step, (m0, l0, a0))

    o_h = acc_f / l_f                                           # deferred normalization
    # Merge heads along lanes -> (TT, C), then one full-K output projection.
    o_m = jnp.concatenate([o_h[hh] for hh in range(n_head)], axis=-1)
    attn = jnp.dot(o_m.astype(jnp.bfloat16), wproj_ref[...],
                   preferred_element_type=jnp.float32) + bproj_ref[0]

    x_t = x_tile_ref[0]                                         # residual via BlockSpec view
    x_mid = x_t + attn

    # ---- MLP ----------------------------------------------------------------
    h2 = _layernorm(x_mid, ln2_w_ref[0], ln2_b_ref[0]).astype(jnp.bfloat16)
    g = jnp.dot(h2, wfc_ref[...], preferred_element_type=jnp.float32) + bfc_ref[0]
    # TODO(synk): Block undefined in spec; tanh-approx GELU assumed.
    g = jax.nn.gelu(g, approximate=True)
    mlp = jnp.dot(g.astype(jnp.bfloat16), wout_ref[...],
                  preferred_element_type=jnp.float32) + bout_ref[0]

    o_ref[0] = x_mid + mlp


def run_block(x, p):
    B, T, C = x.shape
    n_head = p["n_head"]
    hd = C // n_head
    Hm = p["w_fc"].shape[1]
    tile_t = _pick_tile(T, (512, 256, 128) if _BIG_VMEM else (128,))
    nt = T // tile_t

    def cw(shape):  # constant-index weight block (loaded once)
        return pl.BlockSpec(shape, lambda b, t: (0, 0))

    in_specs = [
        pl.BlockSpec((1, T, C), lambda b, t: (b, 0, 0)),        # full seq (for Q/K/V)
        pl.BlockSpec((1, tile_t, C), lambda b, t: (b, t, 0)),   # residual query tile
        cw((1, C)), cw((1, C)),                                 # ln1
        cw((C, C)), cw((1, C)),                                 # w_q, b_q
        cw((C, C)), cw((1, C)),                                 # w_k, b_k
        cw((C, C)), cw((1, C)),                                 # w_v, b_v
        cw((C, C)), cw((1, C)),                                 # w_proj, b_proj
        cw((1, C)), cw((1, C)),                                 # ln2
        cw((C, Hm)), cw((1, Hm)),                               # w_fc, b_fc
        cw((Hm, C)), cw((1, C)),                                # w_out, b_out
    ]
    return pl.pallas_call(
        block_kernel,
        out_shape=jax.ShapeDtypeStruct((B, T, C), jnp.float32),
        grid=(B, nt),
        in_specs=in_specs,
        out_specs=pl.BlockSpec((1, tile_t, C), lambda b, t: (b, t, 0)),
        scratch_shapes=[pltpu.VMEM((n_head, T, hd), jnp.bfloat16),   # Q (pre-scaled)
                        pltpu.VMEM((n_head, T, hd), jnp.bfloat16),   # K
                        pltpu.VMEM((n_head, T, hd), jnp.bfloat16)],  # V
        compiler_params=pltpu.CompilerParams(
            dimension_semantics=("parallel", "arbitrary"),
            vmem_limit_bytes=_VMEM_LIMIT),
    )(x, x,
      p["ln1_w"], p["ln1_b"],
      p["w_q"], p["b_q"], p["w_k"], p["b_k"], p["w_v"], p["b_v"],
      p["w_proj"], p["b_proj"],
      p["ln2_w"], p["ln2_b"],
      p["w_fc"], p["b_fc"], p["w_out"], p["b_out"])


# ---------------------------------------------------------------------------
# Final LayerNorm -> bf16 activations (flattened to (B*T, C)).
# ---------------------------------------------------------------------------
def lnf_kernel(x_ref, w_ref, b_ref, o_ref):
    o_ref[...] = _layernorm(x_ref[...], w_ref[0], b_ref[0]).astype(jnp.bfloat16)


def run_lnf(x, w, b):
    B, T, C = x.shape
    M = B * T
    xf = x.reshape(M, C)
    tile_m = _pick_tile(M, (512, 256, 128))
    return pl.pallas_call(
        lnf_kernel,
        out_shape=jax.ShapeDtypeStruct((M, C), jnp.bfloat16),
        grid=(M // tile_m,),
        in_specs=[pl.BlockSpec((tile_m, C), lambda m: (m, 0)),
                  pl.BlockSpec((1, C), lambda m: (0, 0)),
                  pl.BlockSpec((1, C), lambda m: (0, 0))],
        out_specs=pl.BlockSpec((tile_m, C), lambda m: (m, 0)),
        compiler_params=pltpu.CompilerParams(
            dimension_semantics=("parallel",),
            vmem_limit_bytes=_VMEM_LIMIT),
    )(xf, w, b)


# ---------------------------------------------------------------------------
# Tied lm_head: (B*T, C) bf16 @ (C, V) bf16 -> (B*T, V) f32.
# Grid ordered vocab-outer / rows-inner so each (C, tile_v) wte tile is
# streamed from HBM exactly once (reused across all rows / batch elements);
# the pre-transposed (C, V) weight keeps the MXU path plain [M,K]@[K,N] and
# the output lane-dense in tile_v.
# ---------------------------------------------------------------------------
def head_kernel(h_ref, wte_ref, o_ref):
    o_ref[...] = jnp.dot(h_ref[...], wte_ref[...],
                         preferred_element_type=jnp.float32)


def run_head(h, wte_t):
    M, C = h.shape
    V = wte_t.shape[1]
    tile_m = _pick_tile(M, (512, 256, 128))
    tile_v = _pick_tile(V, (4096, 2048, 1024, 512, 256, 128) if _BIG_VMEM
                        else (2048, 1024, 512, 256, 128))
    return pl.pallas_call(
        head_kernel,
        out_shape=jax.ShapeDtypeStruct((M, V), jnp.float32),
        grid=(V // tile_v, M // tile_m),                 # vocab outer, rows inner
        in_specs=[pl.BlockSpec((tile_m, C), lambda v, m: (m, 0)),
                  pl.BlockSpec((C, tile_v), lambda v, m: (0, v))],
        out_specs=pl.BlockSpec((tile_m, tile_v), lambda v, m: (m, v)),
        compiler_params=pltpu.CompilerParams(
            dimension_semantics=("parallel", "parallel"),
            vmem_limit_bytes=_VMEM_LIMIT),
    )(h, wte_t)


# ---------------------------------------------------------------------------
# Full model forward (embedding gather + learned pos-embed are XLA glue).
# ---------------------------------------------------------------------------
def slm_forward(idx, params):
    B, T = idx.shape
    x = jnp.take(params["wte"], idx, axis=0) + params["wpe"][:T][None, :, :]
    for lp in params["blocks"]:
        x = run_block(x, lp)
    h = run_lnf(x, params["ln_f_w"], params["ln_f_b"])           # (B*T, C) bf16
    logits = run_head(h, params["wte_T_bf16"])                   # (B*T, V) f32
    return logits.reshape(B, T, -1)  # targets=None path -> loss None, as in ref


# ---------------------------------------------------------------------------
# Deterministic parameter init (matches _init_weights semantics: normal(0,0.02)
# for linears/embeddings, zeros for biases, ones/zeros for LayerNorm).  Matmul
# weights are stored [in, out] in bfloat16; the tied head weight is also kept
# pre-transposed as (C, V) bf16.
# ---------------------------------------------------------------------------
def init_params(key, vocab_size, context_len, n_layer, n_embd, n_head):
    std = 0.02
    C, Hm = n_embd, 4 * n_embd
    assert C % n_head == 0
    keys = jax.random.split(key, 2 + n_layer)
    wte = std * jax.random.normal(keys[0], (vocab_size, C), jnp.float32)
    wpe = std * jax.random.normal(keys[1], (context_len, C), jnp.float32)

    def w(k, shape):
        return (std * jax.random.normal(k, shape, jnp.float32)).astype(jnp.bfloat16)

    blocks = []
    for i in range(n_layer):
        k = jax.random.split(keys[2 + i], 6)
        blocks.append(dict(
            n_head=n_head,
            ln1_w=jnp.ones((1, C), jnp.float32), ln1_b=jnp.zeros((1, C), jnp.float32),
            w_q=w(k[0], (C, C)), b_q=jnp.zeros((1, C), jnp.float32),
            w_k=w(k[1], (C, C)), b_k=jnp.zeros((1, C), jnp.float32),
            w_v=w(k[2], (C, C)), b_v=jnp.zeros((1, C), jnp.float32),
            w_proj=w(k[3], (C, C)), b_proj=jnp.zeros((1, C), jnp.float32),
            ln2_w=jnp.ones((1, C), jnp.float32), ln2_b=jnp.zeros((1, C), jnp.float32),
            w_fc=w(k[4], (C, Hm)), b_fc=jnp.zeros((1, Hm), jnp.float32),
            w_out=w(k[5], (Hm, C)), b_out=jnp.zeros((1, C), jnp.float32),
        ))
    return dict(wte=wte, wte_T_bf16=wte.T.astype(jnp.bfloat16), wpe=wpe,
                blocks=blocks,
                ln_f_w=jnp.ones((1, C), jnp.float32),
                ln_f_b=jnp.zeros((1, C), jnp.float32))


if __name__ == "__main__":
    # small config: vocab=64, context_len=16, n_layer=2, n_embd=32, n_head=4
    B, T = 2, 8
    VOCAB, CTX, N_LAYER, N_EMBD, N_HEAD = 64, 16, 2, 32, 4

    key = jax.random.PRNGKey(0)
    k_param, k_idx = jax.random.split(key)
    params = init_params(k_param, VOCAB, CTX, N_LAYER, N_EMBD, N_HEAD)
    idx = jax.random.randint(k_idx, (B, T), 0, VOCAB, dtype=jnp.int32)

    logits = slm_forward(idx, params)
    jax.block_until_ready(logits)
    assert logits.shape == (B, T, VOCAB) and logits.dtype == jnp.float32
    assert bool(jnp.all(jnp.isfinite(logits)))
    print("KERNEL_OK")
</pallas_src>

<mosaic_0001>
module attributes {stable_mosaic.version = 11 : i64} {
  func.func @block_kernel(%arg0: i32, %arg1: i32, %arg2: memref<1x8x32xf32, #tpu.memory_space<vmem>>, %arg3: memref<1x8x32xf32, #tpu.memory_space<vmem>>, %arg4: memref<1x32xf32, #tpu.memory_space<vmem>>, %arg5: memref<1x32xf32, #tpu.memory_space<vmem>>, %arg6: memref<32x32xbf16, #tpu.memory_space<vmem>>, %arg7: memref<1x32xf32, #tpu.memory_space<vmem>>, %arg8: memref<32x32xbf16, #tpu.memory_space<vmem>>, %arg9: memref<1x32xf32, #tpu.memory_space<vmem>>, %arg10: memref<32x32xbf16, #tpu.memory_space<vmem>>, %arg11: memref<1x32xf32, #tpu.memory_space<vmem>>, %arg12: memref<32x32xbf16, #tpu.memory_space<vmem>>, %arg13: memref<1x32xf32, #tpu.memory_space<vmem>>, %arg14: memref<1x32xf32, #tpu.memory_space<vmem>>, %arg15: memref<1x32xf32, #tpu.memory_space<vmem>>, %arg16: memref<32x128xbf16, #tpu.memory_space<vmem>>, %arg17: memref<1x128xf32, #tpu.memory_space<vmem>>, %arg18: memref<128x32xbf16, #tpu.memory_space<vmem>>, %arg19: memref<1x32xf32, #tpu.memory_space<vmem>>, %arg20: memref<1x8x32xf32, #tpu.memory_space<vmem>>, %arg21: memref<4x8x8xbf16, #tpu.memory_space<vmem>>, %arg22: memref<4x8x8xbf16, #tpu.memory_space<vmem>>, %arg23: memref<4x8x8xbf16, #tpu.memory_space<vmem>>) attributes {dimension_semantics = [#tpu.dimension_semantics<parallel>, #tpu.dimension_semantics<arbitrary>], iteration_bounds = array<i64: 2, 1>, scalar_prefetch = 0 : i64, scratch_operands = 3 : i64, tpu.core_type = #tpu.core_type<tc>, window_params = [{transform_indices = @transform_0, window_bounds = array<i64: 1, 8, 32>}, {transform_indices = @transform_1, window_bounds = array<i64: 1, 8, 32>}, {pipeline_mode = #tpu.pipeline_mode<synchronous>, transform_indices = @transform_2, window_bounds = array<i64: 1, 32>}, {pipeline_mode = #tpu.pipeline_mode<synchronous>, transform_indices = @transform_3, window_bounds = array<i64: 1, 32>}, {pipeline_mode = #tpu.pipeline_mode<synchronous>, transform_indices = @transform_4, window_bounds = array<i64: 32, 32>}, {pipeline_mode = #tpu.pipeline_mode<synchronous>, transform_indices = @transform_5, window_bounds = array<i64: 1, 32>}, {pipeline_mode = #tpu.pipeline_mode<synchronous>, transform_indices = @transform_6, window_bounds = array<i64: 32, 32>}, {pipeline_mode = #tpu.pipeline_mode<synchronous>, transform_indices = @transform_7, window_bounds = array<i64: 1, 32>}, {pipeline_mode = #tpu.pipeline_mode<synchronous>, transform_indices = @transform_8, window_bounds = array<i64: 32, 32>}, {pipeline_mode = #tpu.pipeline_mode<synchronous>, transform_indices = @transform_9, window_bounds = array<i64: 1, 32>}, {pipeline_mode = #tpu.pipeline_mode<synchronous>, transform_indices = @transform_10, window_bounds = array<i64: 32, 32>}, {pipeline_mode = #tpu.pipeline_mode<synchronous>, transform_indices = @transform_11, window_bounds = array<i64: 1, 32>}, {pipeline_mode = #tpu.pipeline_mode<synchronous>, transform_indices = @transform_12, window_bounds = array<i64: 1, 32>}, {pipeline_mode = #tpu.pipeline_mode<synchronous>, transform_indices = @transform_13, window_bounds = array<i64: 1, 32>}, {pipeline_mode = #tpu.pipeline_mode<synchronous>, transform_indices = @transform_14, window_bounds = array<i64: 32, 128>}, {pipeline_mode = #tpu.pipeline_mode<synchronous>, transform_indices = @transform_15, window_bounds = array<i64: 1, 128>}, {pipeline_mode = #tpu.pipeline_mode<synchronous>, transform_indices = @transform_16, window_bounds = array<i64: 128, 32>}, {pipeline_mode = #tpu.pipeline_mode<synchronous>, transform_indices = @transform_17, window_bounds = array<i64: 1, 32>}, {transform_indices = @transform_18, window_bounds = array<i64: 1, 8, 32>}]} {
    %c0_i32 = arith.constant 0 : i32
    %0 = arith.cmpi eq, %arg1, %c0_i32 : i32
    %1 = arith.extui %0 : i1 to i32
    %c0_i32_0 = arith.constant 0 : i32
    %2 = arith.cmpi ne, %1, %c0_i32_0 : i32
    scf.if %2 {
      %c0_40 = arith.constant 0 : index
      %c0_41 = arith.constant 0 : index
      %c0_42 = arith.constant 0 : index
      %100 = vector.load %arg2[%c0_40, %c0_41, %c0_42] : memref<1x8x32xf32, #tpu.memory_space<vmem>>, vector<1x8x32xf32>
      %101 = vector.shape_cast %100 : vector<1x8x32xf32> to vector<8x32xf32>
      %c0_43 = arith.constant 0 : index
      %c0_44 = arith.constant 0 : index
      %102 = vector.load %arg4[%c0_43, %c0_44] : memref<1x32xf32, #tpu.memory_space<vmem>>, vector<1x32xf32>
      %103 = vector.shape_cast %102 : vector<1x32xf32> to vector<32xf32>
      %c0_45 = arith.constant 0 : index
      %c0_46 = arith.constant 0 : index
      %104 = vector.load %arg5[%c0_45, %c0_46] : memref<1x32xf32, #tpu.memory_space<vmem>>, vector<1x32xf32>
      %105 = vector.shape_cast %104 : vector<1x32xf32> to vector<32xf32>
      %cst_47 = arith.constant dense<0.000000e+00> : vector<8xf32>
      %106 = vector.multi_reduction <add>, %101, %cst_47 [1] : vector<8x32xf32> to vector<8xf32>
      %107 = vector.shape_cast %106 : vector<8xf32> to vector<8x1xf32>
      %cst_48 = arith.constant 3.200000e+01 : f32
      %108 = vector.broadcast %cst_48 : f32 to vector<8x1xf32>
      %109 = arith.divf %107, %108 : vector<8x1xf32>
      %110 = vector.broadcast %109 : vector<8x1xf32> to vector<8x32xf32>
      %111 = arith.subf %101, %110 : vector<8x32xf32>
      %112 = arith.mulf %111, %111 : vector<8x32xf32>
      %cst_49 = arith.constant dense<0.000000e+00> : vector<8xf32>
      %113 = vector.multi_reduction <add>, %112, %cst_49 [1] : vector<8x32xf32> to vector<8xf32>
      %114 = vector.shape_cast %113 : vector<8xf32> to vector<8x1xf32>
      %cst_50 = arith.constant 3.200000e+01 : f32
      %115 = vector.broadcast %cst_50 : f32 to vector<8x1xf32>
      %116 = arith.divf %114, %115 : vector<8x1xf32>
      %117 = vector.broadcast %109 : vector<8x1xf32> to vector<8x32xf32>
      %118 = arith.subf %101, %117 : vector<8x32xf32>
      %cst_51 = arith.constant 9.99999974E-6 : f32
      %119 = vector.broadcast %cst_51 : f32 to vector<8x1xf32>
      %120 = arith.addf %116, %119 : vector<8x1xf32>
      %121 = math.rsqrt %120 : vector<8x1xf32>
      %122 = vector.broadcast %121 : vector<8x1xf32> to vector<8x32xf32>
      %123 = arith.mulf %118, %122 : vector<8x32xf32>
      %124 = vector.shape_cast %103 : vector<32xf32> to vector<1x32xf32>
      %125 = vector.broadcast %124 : vector<1x32xf32> to vector<8x32xf32>
      %126 = arith.mulf %123, %125 : vector<8x32xf32>
      %127 = vector.shape_cast %105 : vector<32xf32> to vector<1x32xf32>
      %128 = vector.broadcast %127 : vector<1x32xf32> to vector<8x32xf32>
      %129 = arith.addf %126, %128 : vector<8x32xf32>
      %130 = arith.truncf %129 : vector<8x32xf32> to vector<8x32xbf16>
      %c0_52 = arith.constant 0 : index
      %c0_53 = arith.constant 0 : index
      %131 = vector.load %arg6[%c0_52, %c0_53] : memref<32x32xbf16, #tpu.memory_space<vmem>>, vector<32x32xbf16>
      %cst_54 = arith.constant dense<0.000000e+00> : vector<8x32xf32>
      %132 = tpu.matmul %130, %131, %cst_54 {dimension_numbers = #tpu.dot_dimension_numbers<[1], [0], [0], [1], [0, 0, 1, 1], [], []>} : vector<8x32xbf16>, vector<32x32xbf16>, vector<8x32xf32> -> vector<8x32xf32>
      %c0_55 = arith.constant 0 : index
      %c0_56 = arith.constant 0 : index
      %133 = vector.load %arg7[%c0_55, %c0_56] : memref<1x32xf32, #tpu.memory_space<vmem>>, vector<1x32xf32>
      %134 = vector.shape_cast %133 : vector<1x32xf32> to vector<32xf32>
      %135 = vector.shape_cast %134 : vector<32xf32> to vector<1x32xf32>
      %136 = vector.broadcast %135 : vector<1x32xf32> to vector<8x32xf32>
      %137 = arith.addf %132, %136 : vector<8x32xf32>
      %cst_57 = arith.constant 0.353553385 : f32
      %138 = vector.broadcast %cst_57 : f32 to vector<8x32xf32>
      %139 = arith.mulf %137, %138 : vector<8x32xf32>
      %c0_58 = arith.constant 0 : index
      %c0_59 = arith.constant 0 : index
      %140 = vector.load %arg8[%c0_58, %c0_59] : memref<32x32xbf16, #tpu.memory_space<vmem>>, vector<32x32xbf16>
      %cst_60 = arith.constant dense<0.000000e+00> : vector<8x32xf32>
      %141 = tpu.matmul %130, %140, %cst_60 {dimension_numbers = #tpu.dot_dimension_numbers<[1], [0], [0], [1], [0, 0, 1, 1], [], []>} : vector<8x32xbf16>, vector<32x32xbf16>, vector<8x32xf32> -> vector<8x32xf32>
      %c0_61 = arith.constant 0 : index
      %c0_62 = arith.constant 0 : index
      %142 = vector.load %arg9[%c0_61, %c0_62] : memref<1x32xf32, #tpu.memory_space<vmem>>, vector<1x32xf32>
      %143 = vector.shape_cast %142 : vector<1x32xf32> to vector<32xf32>
      %144 = vector.shape_cast %143 : vector<32xf32> to vector<1x32xf32>
      %145 = vector.broadcast %144 : vector<1x32xf32> to vector<8x32xf32>
      %146 = arith.addf %141, %145 : vector<8x32xf32>
      %c0_63 = arith.constant 0 : index
      %c0_64 = arith.constant 0 : index
      %147 = vector.load %arg10[%c0_63, %c0_64] : memref<32x32xbf16, #tpu.memory_space<vmem>>, vector<32x32xbf16>
      %cst_65 = arith.constant dense<0.000000e+00> : vector<8x32xf32>
      %148 = tpu.matmul %130, %147, %cst_65 {dimension_numbers = #tpu.dot_dimension_numbers<[1], [0], [0], [1], [0, 0, 1, 1], [], []>} : vector<8x32xbf16>, vector<32x32xbf16>, vector<8x32xf32> -> vector<8x32xf32>
      %c0_66 = arith.constant 0 : index
      %c0_67 = arith.constant 0 : index
      %149 = vector.load %arg11[%c0_66, %c0_67] : memref<1x32xf32, #tpu.memory_space<vmem>>, vector<1x32xf32>
      %150 = vector.shape_cast %149 : vector<1x32xf32> to vector<32xf32>
      %151 = vector.shape_cast %150 : vector<32xf32> to vector<1x32xf32>
      %152 = vector.broadcast %151 : vector<1x32xf32> to vector<8x32xf32>
      %153 = arith.addf %148, %152 : vector<8x32xf32>
      %154 = vector.extract_strided_slice %139 {offsets = [0, 0], sizes = [8, 8], strides = [1, 1]} : vector<8x32xf32> to vector<8x8xf32>
      %155 = arith.truncf %154 : vector<8x8xf32> to vector<8x8xbf16>
      %c0_68 = arith.constant 0 : index
      %c0_69 = arith.constant 0 : index
      %c0_70 = arith.constant 0 : index
      %156 = vector.load %arg21[%c0_68, %c0_69, %c0_70] : memref<4x8x8xbf16, #tpu.memory_space<vmem>>, vector<1x8x8xbf16>
      %157 = vector.shape_cast %156 : vector<1x8x8xbf16> to vector<8x8xbf16>
      %158 = vector.shape_cast %155 : vector<8x8xbf16> to vector<1x8x8xbf16>
      tpu.vector_store %arg21[%c0_68, %c0_69, %c0_70], %158 {strides = array<i32>} : memref<4x8x8xbf16, #tpu.memory_space<vmem>>, vector<1x8x8xbf16>,
      %159 = vector.extract_strided_slice %146 {offsets = [0, 0], sizes = [8, 8], strides = [1, 1]} : vector<8x32xf32> to vector<8x8xf32>
      %160 = arith.truncf %159 : vector<8x8xf32> to vector<8x8xbf16>
      %c0_71 = arith.constant 0 : index
      %c0_72 = arith.constant 0 : index
      %c0_73 = arith.constant 0 : index
      %161 = vector.load %arg22[%c0_71, %c0_72, %c0_73] : memref<4x8x8xbf16, #tpu.memory_space<vmem>>, vector<1x8x8xbf16>
      %162 = vector.shape_cast %161 : vector<1x8x8xbf16> to vector<8x8xbf16>
      %163 = vector.shape_cast %160 : vector<8x8xbf16> to vector<1x8x8xbf16>
      tpu.vector_store %arg22[%c0_71, %c0_72, %c0_73], %163 {strides = array<i32>} : memref<4x8x8xbf16, #tpu.memory_space<vmem>>, vector<1x8x8xbf16>,
      %164 = vector.extract_strided_slice %153 {offsets = [0, 0], sizes = [8, 8], strides = [1, 1]} : vector<8x32xf32> to vector<8x8xf32>
      %165 = arith.truncf %164 : vector<8x8xf32> to vector<8x8xbf16>
      %c0_74 = arith.constant 0 : index
      %c0_75 = arith.constant 0 : index
      %c0_76 = arith.constant 0 : index
      %166 = vector.load %arg23[%c0_74, %c0_75, %c0_76] : memref<4x8x8xbf16, #tpu.memory_space<vmem>>, vector<1x8x8xbf16>
      %167 = vector.shape_cast %166 : vector<1x8x8xbf16> to vector<8x8xbf16>
      %168 = vector.shape_cast %165 : vector<8x8xbf16> to vector<1x8x8xbf16>
      tpu.vector_store %arg23[%c0_74, %c0_75, %c0_76], %168 {strides = array<i32>} : memref<4x8x8xbf16, #tpu.memory_space<vmem>>, vector<1x8x8xbf16>,
      %169 = vector.extract_strided_slice %139 {offsets = [0, 8], sizes = [8, 8], strides = [1, 1]} : vector<8x32xf32> to vector<8x8xf32>
      %170 = arith.truncf %169 : vector<8x8xf32> to vector<8x8xbf16>
      %c1 = arith.constant 1 : index
      %c0_77 = arith.constant 0 : index
      %c0_78 = arith.constant 0 : index
      %171 = vector.load %arg21[%c1, %c0_77, %c0_78] : memref<4x8x8xbf16, #tpu.memory_space<vmem>>, vector<1x8x8xbf16>
      %172 = vector.shape_cast %171 : vector<1x8x8xbf16> to vector<8x8xbf16>
      %173 = vector.shape_cast %170 : vector<8x8xbf16> to vector<1x8x8xbf16>
      tpu.vector_store %arg21[%c1, %c0_77, %c0_78], %173 {strides = array<i32>} : memref<4x8x8xbf16, #tpu.memory_space<vmem>>, vector<1x8x8xbf16>,
      %174 = vector.extract_strided_slice %146 {offsets = [0, 8], sizes = [8, 8], strides = [1, 1]} : vector<8x32xf32> to vector<8x8xf32>
      %175 = arith.truncf %174 : vector<8x8xf32> to vector<8x8xbf16>
      %c1_79 = arith.constant 1 : index
      %c0_80 = arith.constant 0 : index
      %c0_81 = arith.constant 0 : index
      %176 = vector.load %arg22[%c1_79, %c0_80, %c0_81] : memref<4x8x8xbf16, #tpu.memory_space<vmem>>, vector<1x8x8xbf16>
      %177 = vector.shape_cast %176 : vector<1x8x8xbf16> to vector<8x8xbf16>
      %178 = vector.shape_cast %175 : vector<8x8xbf16> to vector<1x8x8xbf16>
      tpu.vector_store %arg22[%c1_79, %c0_80, %c0_81], %178 {strides = array<i32>} : memref<4x8x8xbf16, #tpu.memory_space<vmem>>, vector<1x8x8xbf16>,
      %179 = vector.extract_strided_slice %153 {offsets = [0, 8], sizes = [8, 8], strides = [1, 1]} : vector<8x32xf32> to vector<8x8xf32>
      %180 = arith.truncf %179 : vector<8x8xf32> to vector<8x8xbf16>
      %c1_82 = arith.constant 1 : index
      %c0_83 = arith.constant 0 : index
      %c0_84 = arith.constant 0 : index
      %181 = vector.load %arg23[%c1_82, %c0_83, %c0_84] : memref<4x8x8xbf16, #tpu.memory_space<vmem>>, vector<1x8x8xbf16>
      %182 = vector.shape_cast %181 : vector<1x8x8xbf16> to vector<8x8xbf16>
      %183 = vector.shape_cast %180 : vector<8x8xbf16> to vector<1x8x8xbf16>
      tpu.vector_store %arg23[%c1_82, %c0_83, %c0_84], %183 {strides = array<i32>} : memref<4x8x8xbf16, #tpu.memory_space<vmem>>, vector<1x8x8xbf16>,
      %184 = vector.extract_strided_slice %139 {offsets = [0, 16], sizes = [8, 8], strides = [1, 1]} : vector<8x32xf32> to vector<8x8xf32>
      %185 = arith.truncf %184 : vector<8x8xf32> to vector<8x8xbf16>
      %c2 = arith.constant 2 : index
      %c0_85 = arith.constant 0 : index
      %c0_86 = arith.constant 0 : index
      %186 = vector.load %arg21[%c2, %c0_85, %c0_86] : memref<4x8x8xbf16, #tpu.memory_space<vmem>>, vector<1x8x8xbf16>
      %187 = vector.shape_cast %186 : vector<1x8x8xbf16> to vector<8x8xbf16>
      %188 = vector.shape_cast %185 : vector<8x8xbf16> to vector<1x8x8xbf16>
      tpu.vector_store %arg21[%c2, %c0_85, %c0_86], %188 {strides = array<i32>} : memref<4x8x8xbf16, #tpu.memory_space<vmem>>, vector<1x8x8xbf16>,
      %189 = vector.extract_strided_slice %146 {offsets = [0, 16], sizes = [8, 8], strides = [1, 1]} : vector<8x32xf32> to vector<8x8xf32>
      %190 = arith.truncf %189 : vector<8x8xf32> to vector<8x8xbf16>
      %c2_87 = arith.constant 2 : index
      %c0_88 = arith.constant 0 : index
      %c0_89 = arith.constant 0 : index
      %191 = vector.load %arg22[%c2_87, %c0_88, %c0_89] : memref<4x8x8xbf16, #tpu.memory_space<vmem>>, vector<1x8x8xbf16>
      %192 = vector.shape_cast %191 : vector<1x8x8xbf16> to vector<8x8xbf16>
      %193 = vector.shape_cast %190 : vector<8x8xbf16> to vector<1x8x8xbf16>
      tpu.vector_store %arg22[%c2_87, %c0_88, %c0_89], %193 {strides = array<i32>} : memref<4x8x8xbf16, #tpu.memory_space<vmem>>, vector<1x8x8xbf16>,
      %194 = vector.extract_strided_slice %153 {offsets = [0, 16], sizes = [8, 8], strides = [1, 1]} : vector<8x32xf32> to vector<8x8xf32>
      %195 = arith.truncf %194 : vector<8x8xf32> to vector<8x8xbf16>
      %c2_90 = arith.constant 2 : index
      %c0_91 = arith.constant 0 : index
      %c0_92 = arith.constant 0 : index
      %196 = vector.load %arg23[%c2_90, %c0_91, %c0_92] : memref<4x8x8xbf16, #tpu.memory_space<vmem>>, vector<1x8x8xbf16>
      %197 = vector.shape_cast %196 : vector<1x8x8xbf16> to vector<8x8xbf16>
      %198 = vector.shape_cast %195 : vector<8x8xbf16> to vector<1x8x8xbf16>
      tpu.vector_store %arg23[%c2_90, %c0_91, %c0_92], %198 {strides = array<i32>} : memref<4x8x8xbf16, #tpu.memory_space<vmem>>, vector<1x8x8xbf16>,
      %199 = vector.extract_strided_slice %139 {offsets = [0, 24], sizes = [8, 8], strides = [1, 1]} : vector<8x32xf32> to vector<8x8xf32>
      %200 = arith.truncf %199 : vector<8x8xf32> to vector<8x8xbf16>
      %c3 = arith.constant 3 : index
      %c0_93 = arith.constant 0 : index
      %c0_94 = arith.constant 0 : index
      %201 = vector.load %arg21[%c3, %c0_93, %c0_94] : memref<4x8x8xbf16, #tpu.memory_space<vmem>>, vector<1x8x8xbf16>
      %202 = vector.shape_cast %201 : vector<1x8x8xbf16> to vector<8x8xbf16>
      %203 = vector.shape_cast %200 : vector<8x8xbf16> to vector<1x8x8xbf16>
      tpu.vector_store %arg21[%c3, %c0_93, %c0_94], %203 {strides = array<i32>} : memref<4x8x8xbf16, #tpu.memory_space<vmem>>, vector<1x8x8xbf16>,
      %204 = vector.extract_strided_slice %146 {offsets = [0, 24], sizes = [8, 8], strides = [1, 1]} : vector<8x32xf32> to vector<8x8xf32>
      %205 = arith.truncf %204 : vector<8x8xf32> to vector<8x8xbf16>
      %c3_95 = arith.constant 3 : index
      %c0_96 = arith.constant 0 : index
      %c0_97 = arith.constant 0 : index
      %206 = vector.load %arg22[%c3_95, %c0_96, %c0_97] : memref<4x8x8xbf16, #tpu.memory_space<vmem>>, vector<1x8x8xbf16>
      %207 = vector.shape_cast %206 : vector<1x8x8xbf16> to vector<8x8xbf16>
      %208 = vector.shape_cast %205 : vector<8x8xbf16> to vector<1x8x8xbf16>
      tpu.vector_store %arg22[%c3_95, %c0_96, %c0_97], %208 {strides = array<i32>} : memref<4x8x8xbf16, #tpu.memory_space<vmem>>, vector<1x8x8xbf16>,
      %209 = vector.extract_strided_slice %153 {offsets = [0, 24], sizes = [8, 8], strides = [1, 1]} : vector<8x32xf32> to vector<8x8xf32>
      %210 = arith.truncf %209 : vector<8x8xf32> to vector<8x8xbf16>
      %c3_98 = arith.constant 3 : index
      %c0_99 = arith.constant 0 : index
      %c0_100 = arith.constant 0 : index
      %211 = vector.load %arg23[%c3_98, %c0_99, %c0_100] : memref<4x8x8xbf16, #tpu.memory_space<vmem>>, vector<1x8x8xbf16>
      %212 = vector.shape_cast %211 : vector<1x8x8xbf16> to vector<8x8xbf16>
      %213 = vector.shape_cast %210 : vector<8x8xbf16> to vector<1x8x8xbf16>
      tpu.vector_store %arg23[%c3_98, %c0_99, %c0_100], %213 {strides = array<i32>} : memref<4x8x8xbf16, #tpu.memory_space<vmem>>, vector<1x8x8xbf16>,
    } else {
    }
    %c8_i32 = arith.constant 8 : i32
    %3 = arith.muli %arg1, %c8_i32 : i32
    %4 = tpu.assume_multiple %3, 8 : i32
    %c0 = arith.constant 0 : index
    %5 = arith.index_cast %4 : i32 to index
    %c0_1 = arith.constant 0 : index
    %6 = vector.load %arg21[%c0, %5, %c0_1] : memref<4x8x8xbf16, #tpu.memory_space<vmem>>, vector<4x8x8xbf16>
    %7 = tpu.iota {dimensions = array<i32: 0>} : vector<8x8xi32>
    %8 = tpu.iota {dimensions = array<i32: 1>} : vector<8x8xi32>
    %9 = arith.cmpi sle, %8, %7 : vector<8x8xi32>
    %cst = arith.constant -1.000000e+30 : f32
    %10 = vector.broadcast %cst : f32 to vector<4x8x1xf32>
    %cst_2 = arith.constant 0.000000e+00 : f32
    %11 = vector.broadcast %cst_2 : f32 to vector<4x8x1xf32>
    %cst_3 = arith.constant 0.000000e+00 : f32
    %12 = vector.broadcast %cst_3 : f32 to vector<4x8x8xf32>
    %c1_i32 = arith.constant 1 : i32
    %13 = arith.addi %arg1, %c1_i32 : i32
    %c0_i32_4 = arith.constant 0 : i32
    %14 = arith.subi %13, %c0_i32_4 : i32
    %15 = arith.addi %c0_i32_4, %14 : i32
    %c1_i32_5 = arith.constant 1 : i32
    %16:3 = scf.for %arg24 = %c0_i32_4 to %15 step %c1_i32_5 iter_args(%arg25 = %10, %arg26 = %11, %arg27 = %12) -> (vector<4x8x1xf32>, vector<4x8x1xf32>, vector<4x8x8xf32>)  : i32 {
      %c8_i32_40 = arith.constant 8 : i32
      %100 = arith.muli %arg24, %c8_i32_40 : i32
      %101 = tpu.assume_multiple %100, 8 : i32
      %c0_41 = arith.constant 0 : index
      %102 = arith.index_cast %101 : i32 to index
      %c0_42 = arith.constant 0 : index
      %103 = vector.load %arg22[%c0_41, %102, %c0_42] : memref<4x8x8xbf16, #tpu.memory_space<vmem>>, vector<4x8x8xbf16>
      %c0_43 = arith.constant 0 : index
      %104 = arith.index_cast %101 : i32 to index
      %c0_44 = arith.constant 0 : index
      %105 = vector.load %arg23[%c0_43, %104, %c0_44] : memref<4x8x8xbf16, #tpu.memory_space<vmem>>, vector<4x8x8xbf16>
      "tpu.trace_start"() <{level = 10 : i32, message = "htd,hsd->hts"}> : () -> ()
      %cst_45 = arith.constant dense<0.000000e+00> : vector<4x8x8xf32>
      %106 = tpu.matmul %6, %103, %cst_45 {dimension_numbers = #tpu.dot_dimension_numbers<[2], [2], [1], [1], [0, 0, 0, 1, 1, 1], [0], [0]>} : vector<4x8x8xbf16>, vector<4x8x8xbf16>, vector<4x8x8xf32> -> vector<4x8x8xf32>
      "tpu.trace_stop"() : () -> ()
      %107 = arith.cmpi slt, %arg24, %arg1 : i32
      %108 = vector.broadcast %107 : i1 to vector<8x8xi1>
      %109 = arith.ori %108, %9 : vector<8x8xi1>
      %110 = vector.shape_cast %109 : vector<8x8xi1> to vector<1x8x8xi1>
      %cst_46 = arith.constant -1.000000e+30 : f32
      %111 = vector.shape_cast %110 : vector<1x8x8xi1> to vector<1x8x8xi1>
      %112 = vector.broadcast %111 : vector<1x8x8xi1> to vector<4x8x8xi1>
      %113 = vector.broadcast %cst_46 : f32 to vector<4x8x8xf32>
      %114 = arith.select %112, %106, %113 : vector<4x8x8xi1>, vector<4x8x8xf32>
      %cst_47 = arith.constant dense<0xFF800000> : vector<4x8xf32>
      %115 = vector.multi_reduction <maximumf>, %114, %cst_47 [2] : vector<4x8x8xf32> to vector<4x8xf32>
      %116 = vector.shape_cast %115 : vector<4x8xf32> to vector<4x8x1xf32>
      %117 = arith.maximumf %arg25, %116 : vector<4x8x1xf32>
      %118 = arith.subf %arg25, %117 : vector<4x8x1xf32>
      %119 = math.exp %118 : vector<4x8x1xf32>
      %120 = vector.broadcast %117 : vector<4x8x1xf32> to vector<4x8x8xf32>
      %121 = arith.subf %114, %120 : vector<4x8x8xf32>
      %122 = math.exp %121 : vector<4x8x8xf32>
      %123 = arith.mulf %119, %arg26 : vector<4x8x1xf32>
      %cst_48 = arith.constant dense<0.000000e+00> : vector<4x8xf32>
      %124 = vector.multi_reduction <add>, %122, %cst_48 [2] : vector<4x8x8xf32> to vector<4x8xf32>
      %125 = vector.shape_cast %124 : vector<4x8xf32> to vector<4x8x1xf32>
      %126 = arith.addf %123, %125 : vector<4x8x1xf32>
      %127 = vector.broadcast %119 : vector<4x8x1xf32> to vector<4x8x8xf32>
      %128 = arith.mulf %127, %arg27 : vector<4x8x8xf32>
      %129 = arith.truncf %122 : vector<4x8x8xf32> to vector<4x8x8xbf16>
      "tpu.trace_start"() <{level = 10 : i32, message = "hts,hsd->htd"}> : () -> ()
      %cst_49 = arith.constant dense<0.000000e+00> : vector<4x8x8xf32>
      %130 = tpu.matmul %129, %105, %cst_49 {dimension_numbers = #tpu.dot_dimension_numbers<[2], [1], [1], [2], [0, 0, 0, 1, 1, 2], [0], [0]>} : vector<4x8x8xbf16>, vector<4x8x8xbf16>, vector<4x8x8xf32> -> vector<4x8x8xf32>
      "tpu.trace_stop"() : () -> ()
      %131 = arith.addf %128, %130 : vector<4x8x8xf32>
      scf.yield %117, %126, %131 : vector<4x8x1xf32>, vector<4x8x1xf32>, vector<4x8x8xf32>
    }
    %17 = vector.broadcast %16#1 : vector<4x8x1xf32> to vector<4x8x8xf32>
    %18 = arith.divf %16#2, %17 : vector<4x8x8xf32>
    %19 = vector.extract_strided_slice %18 {offsets = [0, 0, 0], sizes = [1, 8, 8], strides = [1, 1, 1]} : vector<4x8x8xf32> to vector<1x8x8xf32>
    %20 = vector.shape_cast %19 : vector<1x8x8xf32> to vector<8x8xf32>
    %21 = vector.extract_strided_slice %18 {offsets = [1, 0, 0], sizes = [1, 8, 8], strides = [1, 1, 1]} : vector<4x8x8xf32> to vector<1x8x8xf32>
    %22 = vector.shape_cast %21 : vector<1x8x8xf32> to vector<8x8xf32>
    %23 = vector.extract_strided_slice %18 {offsets = [2, 0, 0], sizes = [1, 8, 8], strides = [1, 1, 1]} : vector<4x8x8xf32> to vector<1x8x8xf32>
    %24 = vector.shape_cast %23 : vector<1x8x8xf32> to vector<8x8xf32>
    %25 = vector.extract_strided_slice %18 {offsets = [3, 0, 0], sizes = [1, 8, 8], strides = [1, 1, 1]} : vector<4x8x8xf32> to vector<1x8x8xf32>
    %26 = vector.shape_cast %25 : vector<1x8x8xf32> to vector<8x8xf32>
    %27 = tpu.concatenate %20, %22, %24, %26 in 1 : vector<8x8xf32>, vector<8x8xf32>, vector<8x8xf32>, vector<8x8xf32> -> vector<8x32xf32>
    %28 = arith.truncf %27 : vector<8x32xf32> to vector<8x32xbf16>
    %c0_6 = arith.constant 0 : index
    %c0_7 = arith.constant 0 : index
    %29 = vector.load %arg12[%c0_6, %c0_7] : memref<32x32xbf16, #tpu.memory_space<vmem>>, vector<32x32xbf16>
    %cst_8 = arith.constant dense<0.000000e+00> : vector<8x32xf32>
    %30 = tpu.matmul %28, %29, %cst_8 {dimension_numbers = #tpu.dot_dimension_numbers<[1], [0], [0], [1], [0, 0, 1, 1], [], []>} : vector<8x32xbf16>, vector<32x32xbf16>, vector<8x32xf32> -> vector<8x32xf32>
    %c0_9 = arith.constant 0 : index
    %c0_10 = arith.constant 0 : index
    %31 = vector.load %arg13[%c0_9, %c0_10] : memref<1x32xf32, #tpu.memory_space<vmem>>, vector<1x32xf32>
    %32 = vector.shape_cast %31 : vector<1x32xf32> to vector<32xf32>
    %33 = vector.shape_cast %32 : vector<32xf32> to vector<1x32xf32>
    %34 = vector.broadcast %33 : vector<1x32xf32> to vector<8x32xf32>
    %35 = arith.addf %30, %34 : vector<8x32xf32>
    %c0_11 = arith.constant 0 : index
    %c0_12 = arith.constant 0 : index
    %c0_13 = arith.constant 0 : index
    %36 = vector.load %arg3[%c0_11, %c0_12, %c0_13] : memref<1x8x32xf32, #tpu.memory_space<vmem>>, vector<1x8x32xf32>
    %37 = vector.shape_cast %36 : vector<1x8x32xf32> to vector<8x32xf32>
    %38 = arith.addf %37, %35 : vector<8x32xf32>
    %c0_14 = arith.constant 0 : index
    %c0_15 = arith.constant 0 : index
    %39 = vector.load %arg14[%c0_14, %c0_15] : memref<1x32xf32, #tpu.memory_space<vmem>>, vector<1x32xf32>
    %40 = vector.shape_cast %39 : vector<1x32xf32> to vector<32xf32>
    %c0_16 = arith.constant 0 : index
    %c0_17 = arith.constant 0 : index
    %41 = vector.load %arg15[%c0_16, %c0_17] : memref<1x32xf32, #tpu.memory_space<vmem>>, vector<1x32xf32>
    %42 = vector.shape_cast %41 : vector<1x32xf32> to vector<32xf32>
    %cst_18 = arith.constant dense<0.000000e+00> : vector<8xf32>
    %43 = vector.multi_reduction <add>, %38, %cst_18 [1] : vector<8x32xf32> to vector<8xf32>
    %44 = vector.shape_cast %43 : vector<8xf32> to vector<8x1xf32>
    %cst_19 = arith.constant 3.200000e+01 : f32
    %45 = vector.broadcast %cst_19 : f32 to vector<8x1xf32>
    %46 = arith.divf %44, %45 : vector<8x1xf32>
    %47 = vector.broadcast %46 : vector<8x1xf32> to vector<8x32xf32>
    %48 = arith.subf %38, %47 : vector<8x32xf32>
    %49 = arith.mulf %48, %48 : vector<8x32xf32>
    %cst_20 = arith.constant dense<0.000000e+00> : vector<8xf32>
    %50 = vector.multi_reduction <add>, %49, %cst_20 [1] : vector<8x32xf32> to vector<8xf32>
    %51 = vector.shape_cast %50 : vector<8xf32> to vector<8x1xf32>
    %cst_21 = arith.constant 3.200000e+01 : f32
    %52 = vector.broadcast %cst_21 : f32 to vector<8x1xf32>
    %53 = arith.divf %51, %52 : vector<8x1xf32>
    %54 = vector.broadcast %46 : vector<8x1xf32> to vector<8x32xf32>
    %55 = arith.subf %38, %54 : vector<8x32xf32>
    %cst_22 = arith.constant 9.99999974E-6 : f32
    %56 = vector.broadcast %cst_22 : f32 to vector<8x1xf32>
    %57 = arith.addf %53, %56 : vector<8x1xf32>
    %58 = math.rsqrt %57 : vector<8x1xf32>
    %59 = vector.broadcast %58 : vector<8x1xf32> to vector<8x32xf32>
    %60 = arith.mulf %55, %59 : vector<8x32xf32>
    %61 = vector.shape_cast %40 : vector<32xf32> to vector<1x32xf32>
    %62 = vector.broadcast %61 : vector<1x32xf32> to vector<8x32xf32>
    %63 = arith.mulf %60, %62 : vector<8x32xf32>
    %64 = vector.shape_cast %42 : vector<32xf32> to vector<1x32xf32>
    %65 = vector.broadcast %64 : vector<1x32xf32> to vector<8x32xf32>
    %66 = arith.addf %63, %65 : vector<8x32xf32>
    %67 = arith.truncf %66 : vector<8x32xf32> to vector<8x32xbf16>
    %c0_23 = arith.constant 0 : index
    %c0_24 = arith.constant 0 : index
    %68 = vector.load %arg16[%c0_23, %c0_24] : memref<32x128xbf16, #tpu.memory_space<vmem>>, vector<32x128xbf16>
    %cst_25 = arith.constant dense<0.000000e+00> : vector<8x128xf32>
    %69 = tpu.matmul %67, %68, %cst_25 {dimension_numbers = #tpu.dot_dimension_numbers<[1], [0], [0], [1], [0, 0, 1, 1], [], []>} : vector<8x32xbf16>, vector<32x128xbf16>, vector<8x128xf32> -> vector<8x128xf32>
    %c0_26 = arith.constant 0 : index
    %c0_27 = arith.constant 0 : index
    %70 = vector.load %arg17[%c0_26, %c0_27] : memref<1x128xf32, #tpu.memory_space<vmem>>, vector<1x128xf32>
    %71 = vector.shape_cast %70 : vector<1x128xf32> to vector<128xf32>
    %72 = vector.shape_cast %71 : vector<128xf32> to vector<1x128xf32>
    %73 = vector.broadcast %72 : vector<1x128xf32> to vector<8x128xf32>
    %74 = arith.addf %69, %73 : vector<8x128xf32>
    %75 = arith.mulf %74, %74 : vector<8x128xf32>
    %76 = arith.mulf %74, %75 : vector<8x128xf32>
    %cst_28 = arith.constant 4.471500e-02 : f32
    %77 = vector.broadcast %cst_28 : f32 to vector<8x128xf32>
    %78 = arith.mulf %77, %76 : vector<8x128xf32>
    %79 = arith.addf %74, %78 : vector<8x128xf32>
    %cst_29 = arith.constant 0.797884583 : f32
    %80 = vector.broadcast %cst_29 : f32 to vector<8x128xf32>
    %81 = arith.mulf %80, %79 : vector<8x128xf32>
    %82 = math.tanh %81 : vector<8x128xf32>
    %cst_30 = arith.constant 1.000000e+00 : f32
    %83 = vector.broadcast %cst_30 : f32 to vector<8x128xf32>
    %84 = arith.addf %83, %82 : vector<8x128xf32>
    %cst_31 = arith.constant 5.000000e-01 : f32
    %85 = vector.broadcast %cst_31 : f32 to vector<8x128xf32>
    %86 = arith.mulf %85, %84 : vector<8x128xf32>
    %87 = arith.mulf %74, %86 : vector<8x128xf32>
    %88 = arith.truncf %87 : vector<8x128xf32> to vector<8x128xbf16>
    %c0_32 = arith.constant 0 : index
    %c0_33 = arith.constant 0 : index
    %89 = vector.load %arg18[%c0_32, %c0_33] : memref<128x32xbf16, #tpu.memory_space<vmem>>, vector<128x32xbf16>
    %cst_34 = arith.constant dense<0.000000e+00> : vector<8x32xf32>
    %90 = tpu.matmul %88, %89, %cst_34 {dimension_numbers = #tpu.dot_dimension_numbers<[1], [0], [0], [1], [0, 0, 1, 1], [], []>} : vector<8x128xbf16>, vector<128x32xbf16>, vector<8x32xf32> -> vector<8x32xf32>
    %c0_35 = arith.constant 0 : index
    %c0_36 = arith.constant 0 : index
    %91 = vector.load %arg19[%c0_35, %c0_36] : memref<1x32xf32, #tpu.memory_space<vmem>>, vector<1x32xf32>
    %92 = vector.shape_cast %91 : vector<1x32xf32> to vector<32xf32>
    %93 = vector.shape_cast %92 : vector<32xf32> to vector<1x32xf32>
    %94 = vector.broadcast %93 : vector<1x32xf32> to vector<8x32xf32>
    %95 = arith.addf %90, %94 : vector<8x32xf32>
    %96 = arith.addf %38, %95 : vector<8x32xf32>
    %c0_37 = arith.constant 0 : index
    %c0_38 = arith.constant 0 : index
    %c0_39 = arith.constant 0 : index
    %97 = vector.load %arg20[%c0_37, %c0_38, %c0_39] : memref<1x8x32xf32, #tpu.memory_space<vmem>>, vector<1x8x32xf32>
    %98 = vector.shape_cast %97 : vector<1x8x32xf32> to vector<8x32xf32>
    %99 = vector.shape_cast %96 : vector<8x32xf32> to vector<1x8x32xf32>
    tpu.vector_store %arg20[%c0_37, %c0_38, %c0_39], %99 {strides = array<i32>} : memref<1x8x32xf32, #tpu.memory_space<vmem>>, vector<1x8x32xf32>,
    return
  }
  func.func @transform_0(%arg0: i32, %arg1: i32) -> (i32, i32, i32) {
    %c0_i32 = arith.constant 0 : i32
    %c0_i32_0 = arith.constant 0 : i32
    %c0_i32_1 = arith.constant 0 : i32
    return %arg0, %c0_i32, %c0_i32_0 : i32, i32, i32
  }
  func.func @transform_1(%arg0: i32, %arg1: i32) -> (i32, i32, i32) {
    %c0_i32 = arith.constant 0 : i32
    %c0_i32_0 = arith.constant 0 : i32
    return %arg0, %arg1, %c0_i32 : i32, i32, i32
  }
  func.func @transform_2(%arg0: i32, %arg1: i32) -> (i32, i32) {
    %c0_i32 = arith.constant 0 : i32
    %c0_i32_0 = arith.constant 0 : i32
    %c0_i32_1 = arith.constant 0 : i32
    return %c0_i32, %c0_i32_0 : i32, i32
  }
  func.func @transform_3(%arg0: i32, %arg1: i32) -> (i32, i32) {
    %c0_i32 = arith.constant 0 : i32
    %c0_i32_0 = arith.constant 0 : i32
    %c0_i32_1 = arith.constant 0 : i32
    return %c0_i32, %c0_i32_0 : i32, i32
  }
  func.func @transform_4(%arg0: i32, %arg1: i32) -> (i32, i32) {
    %c0_i32 = arith.constant 0 : i32
    %c0_i32_0 = arith.constant 0 : i32
    %c0_i32_1 = arith.constant 0 : i32
    return %c0_i32, %c0_i32_0 : i32, i32
  }
  func.func @transform_5(%arg0: i32, %arg1: i32) -> (i32, i32) {
    %c0_i32 = arith.constant 0 : i32
    %c0_i32_0 = arith.constant 0 : i32
    %c0_i32_1 = arith.constant 0 : i32
    return %c0_i32, %c0_i32_0 : i32, i32
  }
  func.func @transform_6(%arg0: i32, %arg1: i32) -> (i32, i32) {
    %c0_i32 = arith.constant 0 : i32
    %c0_i32_0 = arith.constant 0 : i32
    %c0_i32_1 = arith.constant 0 : i32
    return %c0_i32, %c0_i32_0 : i32, i32
  }
  func.func @transform_7(%arg0: i32, %arg1: i32) -> (i32, i32) {
    %c0_i32 = arith.constant 0 : i32
    %c0_i32_0 = arith.constant 0 : i32
    %c0_i32_1 = arith.constant 0 : i32
    return %c0_i32, %c0_i32_0 : i32, i32
  }
  func.func @transform_8(%arg0: i32, %arg1: i32) -> (i32, i32) {
    %c0_i32 = arith.constant 0 : i32
    %c0_i32_0 = arith.constant 0 : i32
    %c0_i32_1 = arith.constant 0 : i32
    return %c0_i32, %c0_i32_0 : i32, i32
  }
  func.func @transform_9(%arg0: i32, %arg1: i32) -> (i32, i32) {
    %c0_i32 = arith.constant 0 : i32
    %c0_i32_0 = arith.constant 0 : i32
    %c0_i32_1 = arith.constant 0 : i32
    return %c0_i32, %c0_i32_0 : i32, i32
  }
  func.func @transform_10(%arg0: i32, %arg1: i32) -> (i32, i32) {
    %c0_i32 = arith.constant 0 : i32
    %c0_i32_0 = arith.constant 0 : i32
    %c0_i32_1 = arith.constant 0 : i32
    return %c0_i32, %c0_i32_0 : i32, i32
  }
  func.func @transform_11(%arg0: i32, %arg1: i32) -> (i32, i32) {
    %c0_i32 = arith.constant 0 : i32
    %c0_i32_0 = arith.constant 0 : i32
    %c0_i32_1 = arith.constant 0 : i32
    return %c0_i32, %c0_i32_0 : i32, i32
  }
  func.func @transform_12(%arg0: i32, %arg1: i32) -> (i32, i32) {
    %c0_i32 = arith.constant 0 : i32
    %c0_i32_0 = arith.constant 0 : i32
    %c0_i32_1 = arith.constant 0 : i32
    return %c0_i32, %c0_i32_0 : i32, i32
  }
  func.func @transform_13(%arg0: i32, %arg1: i32) -> (i32, i32) {
    %c0_i32 = arith.constant 0 : i32
    %c0_i32_0 = arith.constant 0 : i32
    %c0_i32_1 = arith.constant 0 : i32
    return %c0_i32, %c0_i32_0 : i32, i32
  }
  func.func @transform_14(%arg0: i32, %arg1: i32) -> (i32, i32) {
    %c0_i32 = arith.constant 0 : i32
    %c0_i32_0 = arith.constant 0 : i32
    %c0_i32_1 = arith.constant 0 : i32
    return %c0_i32, %c0_i32_0 : i32, i32
  }
  func.func @transform_15(%arg0: i32, %arg1: i32) -> (i32, i32) {
    %c0_i32 = arith.constant 0 : i32
    %c0_i32_0 = arith.constant 0 : i32
    %c0_i32_1 = arith.constant 0 : i32
    return %c0_i32, %c0_i32_0 : i32, i32
  }
  func.func @transform_16(%arg0: i32, %arg1: i32) -> (i32, i32) {
    %c0_i32 = arith.constant 0 : i32
    %c0_i32_0 = arith.constant 0 : i32
    %c0_i32_1 = arith.constant 0 : i32
    return %c0_i32, %c0_i32_0 : i32, i32
  }
  func.func @transform_17(%arg0: i32, %arg1: i32) -> (i32, i32) {
    %c0_i32 = arith.constant 0 : i32
    %c0_i32_0 = arith.constant 0 : i32
    %c0_i32_1 = arith.constant 0 : i32
    return %c0_i32, %c0_i32_0 : i32, i32
  }
  func.func @transform_18(%arg0: i32, %arg1: i32) -> (i32, i32, i32) {
    %c0_i32 = arith.constant 0 : i32
    %c0_i32_0 = arith.constant 0 : i32
    return %arg0, %arg1, %c0_i32 : i32, i32, i32
  }
}

</mosaic_0001>

<llo_original>
// kernel: tpu_custom_call.1
$region0: #{tpu_custom_call.1}
  #allocation0 [shape = 'u32[]', space=smem, size = 0x4, offset = 0x4, fixed_abs, tag = 'smem constant byte address 0x4 - core index']
  #allocation1 [shape = 'u32[72,128]{1,0:T(1,128)}', space=vmem, size = 0x9000, scoped, tag = 'internal scratch']
  #allocation2 [shape = 'bf16[4,8,8]{2,1,0:T(8,128)(2,1)}', space=vmem, size = 0x2000, scoped, tag = 'scratch operand']
  #allocation3 [shape = 'bf16[4,8,8]{2,1,0:T(8,128)(2,1)}', space=vmem, size = 0x2000, scoped, tag = 'scratch operand']
  #allocation4 [shape = 'bf16[4,8,8]{2,1,0:T(8,128)(2,1)}', space=vmem, size = 0x2000, scoped, tag = 'scratch operand']
  %s0 = inlined_call_operand.vmem [shape: f32[2,8,32], index: 0, kind: input, shape index: {}]
  %s1 = inlined_call_operand.vmem [shape: f32[2,8,32], index: 1, kind: input, shape index: {}]
  %s2 = inlined_call_operand.vmem [shape: f32[1,32], index: 2, kind: input, shape index: {}]
  %s3 = inlined_call_operand.vmem [shape: f32[1,32], index: 3, kind: input, shape index: {}]
  %s4 = inlined_call_operand.vmem [shape: bf16[32,32], index: 4, kind: input, shape index: {}]
  %s5 = inlined_call_operand.vmem [shape: f32[1,32], index: 5, kind: input, shape index: {}]
  %s6 = inlined_call_operand.vmem [shape: bf16[32,32], index: 6, kind: input, shape index: {}]
  %s7 = inlined_call_operand.vmem [shape: f32[1,32], index: 7, kind: input, shape index: {}]
  %s8 = inlined_call_operand.vmem [shape: bf16[32,32], index: 8, kind: input, shape index: {}]
  %s9 = inlined_call_operand.vmem [shape: f32[1,32], index: 9, kind: input, shape index: {}]
  %s10 = inlined_call_operand.hbm [shape: bf16[32,32], index: 10, kind: input, shape index: {}]
  %s11 = inlined_call_operand.vmem [shape: f32[1,32], index: 11, kind: input, shape index: {}]
  %s12 = inlined_call_operand.vmem [shape: f32[1,32], index: 12, kind: input, shape index: {}]
  %s13 = inlined_call_operand.vmem [shape: f32[1,32], index: 13, kind: input, shape index: {}]
  %s14 = inlined_call_operand.hbm [shape: bf16[32,128], index: 14, kind: input, shape index: {}]
  %s15 = inlined_call_operand.vmem [shape: f32[1,128], index: 15, kind: input, shape index: {}]
  %s16 = inlined_call_operand.vmem [shape: bf16[128,32], index: 16, kind: input, shape index: {}]
  %s17 = inlined_call_operand.vmem [shape: f32[1,32], index: 17, kind: input, shape index: {}]
  %s18 = inlined_call_operand.hbm [shape: f32[2,8,32], index: 18, kind: output, shape index: {}]
  %s19 = sld [smem:[#allocation0]]
  $region124: #{tpu_custom_call.1} parent=0
    _
  %s21 = ssub.s32 1, %s19
  %s22 = scalar_select 0, %s21, %s19
  $region1: #{tpu_custom_call.1} parent=0
    #allocation5 [shape = 'u8[8192]{0}', space=vmem, size = 0x2000, scoped, tag = 'input window, operand 10, single buffered']
    #allocation6 [shape = 's32[2]{0}', space=sflag, size = 0x8, scoped, tag = 'scoped memory for tpu_custom_call.1']
    #allocation7 [shape = 's32[2]{0}', space=sflag, size = 0x8, scoped, tag = 'scoped memory for tpu_custom_call.1']
    #allocation8 [shape = 'u8[8192]{0}', space=vmem, size = 0x2000, scoped, tag = 'input window, operand 14, single buffered']
    #allocation9 [shape = 's32[1]{0}', space=sflag, size = 0x4, scoped, tag = 'scoped memory for tpu_custom_call.1']
    #allocation10 [shape = 'u8[8192]{0}', space=vmem, size = 0x2000, scoped, tag = 'output window, operand 0']
    %23 = vsyncpa [#allocation6], 0
    %24 = vsyncpa [#allocation9], 0
    %25 = vsyncpa [#allocation7], 0
    %s26 = scalar_lea.sflag [#allocation7], 1
    %27 = vsyncpa %s26, 0
    loop: start=0, step=1, limit=4
    $region2: #{tpu_custom_call.1} parent=1 // loop_pre_header
      _
    $region3: #{tpu_custom_call.1} parent=1 // loop_header
      %s29 = sphi 0, %s33
      %p30 = scmp.ge.s32.totalorder %s29, 4
      %s36 = sphi 0, %s48
      %s37 = sphi 0, %s44
      %s38 = sphi 0, %s36
      %s39 = sphi 0, %s37
      %s40 = sphi 0, %s38
      %s41 = sphi 0, %s39
      %s51 = sphi 0, %s53
      %s54 = sphi 0, %s51
      %s55 = sphi 0, %s54
      %s71 = sphi 0, %s55
      %s79 = sphi 0, %s81
      %s82 = sphi 0, %s79
      %s83 = sphi 0, %s82
      %s99 = sphi 0, %s83
      %s103 = sphi 0, %s103
      %s105 = sphi 0, %s103
      %s106 = sphi 0, %s105
      %s120 = sphi 0, %s106
      %s124 = sphi 0, %s124
      %s126 = sphi 0, %s124
      %s127 = sphi 0, %s126
      %s141 = sphi 0, %s127
      %s145 = sphi 0, %s145
      %s147 = sphi 0, %s145
      %s148 = sphi 0, %s147
      %s162 = sphi 0, %s148
      %s166 = sphi 0, %s166
      %s168 = sphi 0, %s166
      %s169 = sphi 0, %s168
      %s183 = sphi 0, %s169
      %s187 = sphi 0, %s187
      %s189 = sphi 0, %s187
      %s190 = sphi 0, %s189
      %s204 = sphi 0, %s190
      %s208 = sphi 0, %s208
      %s210 = sphi 0, %s208
      %s211 = sphi 0, %s210
      %s225 = sphi 0, %s211
      %s229 = sphi 0, %s229
      %s231 = sphi 0, %s229
      %s232 = sphi 0, %s231
      %s246 = sphi 0, %s232
      %s250 = sphi 0, %s250
      %s252 = sphi 0, %s250
      %s253 = sphi 0, %s252
      %s267 = sphi 0, %s253
      %s271 = sphi 0, %s271
      %s273 = sphi 0, %s271
      %s274 = sphi 0, %s273
      %s288 = sphi 0, %s274
      %s292 = sphi 0, %s292
      %s294 = sphi 0, %s292
      %s295 = sphi 0, %s294
      %s309 = sphi 0, %s295
      %s313 = sphi 0, %s313
      %s315 = sphi 0, %s313
      %s316 = sphi 0, %s315
      %s330 = sphi 0, %s316
      %s334 = sphi 0, %s334
      %s336 = sphi 0, %s334
      %s337 = sphi 0, %s336
      %s351 = sphi 0, %s337
      %s355 = sphi 0, %s355
      %s357 = sphi 0, %s355
      %s358 = sphi 0, %s357
      %s372 = sphi 0, %s358
      %s376 = sphi 0, %s376
      %s378 = sphi 0, %s376
      %s379 = sphi 0, %s378
      %s393 = sphi 0, %s379
      %s397 = sphi 0, %s397
      %s399 = sphi 0, %s397
      %s400 = sphi 0, %s399
      %s414 = sphi 0, %s400
      %s418 = sphi 0, %s418
      %s420 = sphi 0, %s418
      %s421 = sphi 0, %s420
      %s435 = sphi 0, %s421
      %s443 = sphi 0, %s445
      %s446 = sphi 0, %s443
      %s447 = sphi 0, %s446
      %s463 = sphi 0, %s447
    $region4: #{tpu_custom_call.1} parent=1 // loop_header_branch
      %32 = sbr.rel (%p30) target = $region8
    $region5: #{tpu_custom_call.1} parent=1 // loop_body
      %s34 = ssub.s32 %s29, 1
      %s35 = ssub.s32 %s29, 2
      %s42 = sadd.s32 1, %s37
      %p43 = scmp.ge.s32.totalorder %s42, 1
      %s44 = scalar_select %p43, 0, %s42
      %s45 = sadd.s32 1, %s36
      %s46 = scalar_select %p43, %s45, %s36
      %p47 = scmp.ge.s32.totalorder %s46, 2
      %s48 = scalar_select %p47, 0, %s46
      %s49 = ssub.s32 %s36, %s48
      %p50 = scmp.eq.s32.totalorder %s49, 0
      %s52 = sadd.s32 %s51, 1
      %s53 = scalar_select %p50, %s51, %s52
      %p56 = pneg %p50
      %p57 = scmp.eq.s32.totalorder %s29, 1
      %p58 = por %p56, %p57
      %p59 = scmp.ne.s32.totalorder %s51, %s54
      %p60 = scmp.eq.s32.totalorder %s29, 0
      %p61 = por %p59, %p60
      %p62 = scmp.ne.s32.totalorder %s51, %s54
      %p63 = scmp.eq.s32.totalorder %s34, 1
      %p64 = por %p62, %p63
      %p65 = scmp.ne.s32.totalorder %s54, %s55
      %p66 = scmp.eq.s32.totalorder %s34, 0
      %p67 = por %p65, %p66
      %p68 = scmp.ne.s32.totalorder %s54, %s55
      %p69 = scmp.eq.s32.totalorder %s35, 1
      %p70 = por %p68, %p69
      %p72 = scmp.ne.s32.totalorder %s55, %s71
      %p73 = scmp.eq.s32.totalorder %s35, 0
      %p74 = por %p72, %p73
      %s75 = ssub.s32 %s36, %s48
      %s76 = ssub.s32 %s37, %s44
      %s77 = sor.u32 %s75, %s76
      %p78 = scmp.eq.s32.totalorder %s77, 0
      %s80 = sadd.s32 %s79, 1
      %s81 = scalar_select %p78, %s79, %s80
      %p84 = pneg %p78
      %p85 = scmp.eq.s32.totalorder %s29, 1
      %p86 = por %p84, %p85
      %p87 = scmp.ne.s32.totalorder %s79, %s82
      %p88 = scmp.eq.s32.totalorder %s29, 0
      %p89 = por %p87, %p88
      %p90 = scmp.ne.s32.totalorder %s79, %s82
      %p91 = scmp.eq.s32.totalorder %s34, 1
      %p92 = por %p90, %p91
      %p93 = scmp.ne.s32.totalorder %s82, %s83
      %p94 = scmp.eq.s32.totalorder %s34, 0
      %p95 = por %p93, %p94
      %p96 = scmp.ne.s32.totalorder %s82, %s83
      %p97 = scmp.eq.s32.totalorder %s35, 1
      %p98 = por %p96, %p97
      %p100 = scmp.ne.s32.totalorder %s83, %s99
      %p101 = scmp.eq.s32.totalorder %s35, 0
      %p102 = por %p100, %p101
      %s104 = sadd.s32 %s103, 1
      %p107 = scmp.eq.s32.totalorder %s29, 1
      %p108 = scmp.ne.s32.totalorder %s103, %s105
      %p109 = scmp.eq.s32.totalorder %s29, 0
      %p110 = por %p108, %p109
      %p111 = scmp.ne.s32.totalorder %s103, %s105
      %p112 = scmp.eq.s32.totalorder %s34, 1
      %p113 = por %p111, %p112
      %p114 = scmp.ne.s32.totalorder %s105, %s106
      %p115 = scmp.eq.s32.totalorder %s34, 0
      %p116 = por %p114, %p115
      %p117 = scmp.ne.s32.totalorder %s105, %s106
      %p118 = scmp.eq.s32.totalorder %s35, 1
      %p119 = por %p117, %p118
      %p121 = scmp.ne.s32.totalorder %s106, %s120
      %p122 = scmp.eq.s32.totalorder %s35, 0
      %p123 = por %p121, %p122
      %s125 = sadd.s32 %s124, 1
      %p128 = scmp.eq.s32.totalorder %s29, 1
      %p129 = scmp.ne.s32.totalorder %s124, %s126
      %p130 = scmp.eq.s32.totalorder %s29, 0
      %p131 = por %p129, %p130
      %p132 = scmp.ne.s32.totalorder %s124, %s126
      %p133 = scmp.eq.s32.totalorder %s34, 1
      %p134 = por %p132, %p133
      %p135 = scmp.ne.s32.totalorder %s126, %s127
      %p136 = scmp.eq.s32.totalorder %s34, 0
      %p137 = por %p135, %p136
      %p138 = scmp.ne.s32.totalorder %s126, %s127
      %p139 = scmp.eq.s32.totalorder %s35, 1
      %p140 = por %p138, %p139
      %p142 = scmp.ne.s32.totalorder %s127, %s141
      %p143 = scmp.eq.s32.totalorder %s35, 0
      %p144 = por %p142, %p143
      %s146 = sadd.s32 %s145, 1
      %p149 = scmp.eq.s32.totalorder %s29, 1
      %p150 = scmp.ne.s32.totalorder %s145, %s147
      %p151 = scmp.eq.s32.totalorder %s29, 0
      %p152 = por %p150, %p151
      %p153 = scmp.ne.s32.totalorder %s145, %s147
      %p154 = scmp.eq.s32.totalorder %s34, 1
      %p155 = por %p153, %p154
      %p156 = scmp.ne.s32.totalorder %s147, %s148
      %p157 = scmp.eq.s32.totalorder %s34, 0
      %p158 = por %p156, %p157
      %p159 = scmp.ne.s32.totalorder %s147, %s148
      %p160 = scmp.eq.s32.totalorder %s35, 1
      %p161 = por %p159, %p160
      %p163 = scmp.ne.s32.totalorder %s148, %s162
      %p164 = scmp.eq.s32.totalorder %s35, 0
      %p165 = por %p163, %p164
      %s167 = sadd.s32 %s166, 1
      %p170 = scmp.eq.s32.totalorder %s29, 1
      %p171 = scmp.ne.s32.totalorder %s166, %s168
      %p172 = scmp.eq.s32.totalorder %s29, 0
      %p173 = por %p171, %p172
      %p174 = scmp.ne.s32.totalorder %s166, %s168
      %p175 = scmp.eq.s32.totalorder %s34, 1
      %p176 = por %p174, %p175
      %p177 = scmp.ne.s32.totalorder %s168, %s169
      %p178 = scmp.eq.s32.totalorder %s34, 0
      %p179 = por %p177, %p178
      %p180 = scmp.ne.s32.totalorder %s168, %s169
      %p181 = scmp.eq.s32.totalorder %s35, 1
      %p182 = por %p180, %p181
      %p184 = scmp.ne.s32.totalorder %s169, %s183
      %p185 = scmp.eq.s32.totalorder %s35, 0
      %p186 = por %p184, %p185
      %s188 = sadd.s32 %s187, 1
      %p191 = scmp.eq.s32.totalorder %s29, 1
      %p192 = scmp.ne.s32.totalorder %s187, %s189
      %p193 = scmp.eq.s32.totalorder %s29, 0
      %p194 = por %p192, %p193
      %p195 = scmp.ne.s32.totalorder %s187, %s189
      %p196 = scmp.eq.s32.totalorder %s34, 1
      %p197 = por %p195, %p196
      %p198 = scmp.ne.s32.totalorder %s189, %s190
      %p199 = scmp.eq.s32.totalorder %s34, 0
      %p200 = por %p198, %p199
      %p201 = scmp.ne.s32.totalorder %s189, %s190
      %p202 = scmp.eq.s32.totalorder %s35, 1
      %p203 = por %p201, %p202
      %p205 = scmp.ne.s32.totalorder %s190, %s204
      %p206 = scmp.eq.s32.totalorder %s35, 0
      %p207 = por %p205, %p206
      %s209 = sadd.s32 %s208, 1
      %p212 = scmp.eq.s32.totalorder %s29, 1
      %p213 = scmp.ne.s32.totalorder %s208, %s210
      %p214 = scmp.eq.s32.totalorder %s29, 0
      %p215 = por %p213, %p214
      %p216 = scmp.ne.s32.totalorder %s208, %s210
      %p217 = scmp.eq.s32.totalorder %s34, 1
      %p218 = por %p216, %p217
      %p219 = scmp.ne.s32.totalorder %s210, %s211
      %p220 = scmp.eq.s32.totalorder %s34, 0
      %p221 = por %p219, %p220
      %p222 = scmp.ne.s32.totalorder %s210, %s211
      %p223 = scmp.eq.s32.totalorder %s35, 1
      %p224 = por %p222, %p223
      %p226 = scmp.ne.s32.totalorder %s211, %s225
      %p227 = scmp.eq.s32.totalorder %s35, 0
      %p228 = por %p226, %p227
      %s230 = sadd.s32 %s229, 1
      %p233 = scmp.eq.s32.totalorder %s29, 1
      %p234 = scmp.ne.s32.totalorder %s229, %s231
      %p235 = scmp.eq.s32.totalorder %s29, 0
      %p236 = por %p234, %p235
      %p237 = scmp.ne.s32.totalorder %s229, %s231
      %p238 = scmp.eq.s32.totalorder %s34, 1
      %p239 = por %p237, %p238
      %p240 = scmp.ne.s32.totalorder %s231, %s232
      %p241 = scmp.eq.s32.totalorder %s34, 0
      %p242 = por %p240, %p241
      %p243 = scmp.ne.s32.totalorder %s231, %s232
      %p244 = scmp.eq.s32.totalorder %s35, 1
      %p245 = por %p243, %p244
      %p247 = scmp.ne.s32.totalorder %s232, %s246
      %p248 = scmp.eq.s32.totalorder %s35, 0
      %p249 = por %p247, %p248
      %s251 = sadd.s32 %s250, 1
      %p254 = scmp.eq.s32.totalorder %s29, 1
      %p255 = scmp.ne.s32.totalorder %s250, %s252
      %p256 = scmp.eq.s32.totalorder %s29, 0
      %p257 = por %p255, %p256
      %p258 = scmp.ne.s32.totalorder %s250, %s252
      %p259 = scmp.eq.s32.totalorder %s34, 1
      %p260 = por %p258, %p259
      %p261 = scmp.ne.s32.totalorder %s252, %s253
      %p262 = scmp.eq.s32.totalorder %s34, 0
      %p263 = por %p261, %p262
      %p264 = scmp.ne.s32.totalorder %s252, %s253
      %p265 = scmp.eq.s32.totalorder %s35, 1
      %p266 = por %p264, %p265
      %p268 = scmp.ne.s32.totalorder %s253, %s267
      %p269 = scmp.eq.s32.totalorder %s35, 0
      %p270 = por %p268, %p269
      %s272 = sadd.s32 %s271, 1
      %p275 = scmp.eq.s32.totalorder %s29, 1
      %p276 = scmp.ne.s32.totalorder %s271, %s273
      %p277 = scmp.eq.s32.totalorder %s29, 0
      %p278 = por %p276, %p277
      %p279 = scmp.ne.s32.totalorder %s271, %s273
      %p280 = scmp.eq.s32.totalorder %s34, 1
      %p281 = por %p279, %p280
      %p282 = scmp.ne.s32.totalorder %s273, %s274
      %p283 = scmp.eq.s32.totalorder %s34, 0
      %p284 = por %p282, %p283
      %p285 = scmp.ne.s32.totalorder %s273, %s274
      %p286 = scmp.eq.s32.totalorder %s35, 1
      %p287 = por %p285, %p286
      %p289 = scmp.ne.s32.totalorder %s274, %s288
      %p290 = scmp.eq.s32.totalorder %s35, 0
      %p291 = por %p289, %p290
      %s293 = sadd.s32 %s292, 1
      %p296 = scmp.eq.s32.totalorder %s29, 1
      %p297 = scmp.ne.s32.totalorder %s292, %s294
      %p298 = scmp.eq.s32.totalorder %s29, 0
      %p299 = por %p297, %p298
      %p300 = scmp.ne.s32.totalorder %s292, %s294
      %p301 = scmp.eq.s32.totalorder %s34, 1
      %p302 = por %p300, %p301
      %p303 = scmp.ne.s32.totalorder %s294, %s295
      %p304 = scmp.eq.s32.totalorder %s34, 0
      %p305 = por %p303, %p304
      %p306 = scmp.ne.s32.totalorder %s294, %s295
      %p307 = scmp.eq.s32.totalorder %s35, 1
      %p308 = por %p306, %p307
      %p310 = scmp.ne.s32.totalorder %s295, %s309
      %p311 = scmp.eq.s32.totalorder %s35, 0
      %p312 = por %p310, %p311
      %s314 = sadd.s32 %s313, 1
      %p317 = scmp.eq.s32.totalorder %s29, 1
      %p318 = scmp.ne.s32.totalorder %s313, %s315
      %p319 = scmp.eq.s32.totalorder %s29, 0
      %p320 = por %p318, %p319
      %p321 = scmp.ne.s32.totalorder %s313, %s315
      %p322 = scmp.eq.s32.totalorder %s34, 1
      %p323 = por %p321, %p322
      %p324 = scmp.ne.s32.totalorder %s315, %s316
      %p325 = scmp.eq.s32.totalorder %s34, 0
      %p326 = por %p324, %p325
      %p327 = scmp.ne.s32.totalorder %s315, %s316
      %p328 = scmp.eq.s32.totalorder %s35, 1
      %p329 = por %p327, %p328
      %p331 = scmp.ne.s32.totalorder %s316, %s330
      %p332 = scmp.eq.s32.totalorder %s35, 0
      %p333 = por %p331, %p332
      %s335 = sadd.s32 %s334, 1
      %p338 = scmp.eq.s32.totalorder %s29, 1
      %p339 = scmp.ne.s32.totalorder %s334, %s336
      %p340 = scmp.eq.s32.totalorder %s29, 0
      %p341 = por %p339, %p340
      %p342 = scmp.ne.s32.totalorder %s334, %s336
      %p343 = scmp.eq.s32.totalorder %s34, 1
      %p344 = por %p342, %p343
      %p345 = scmp.ne.s32.totalorder %s336, %s337
      %p346 = scmp.eq.s32.totalorder %s34, 0
      %p347 = por %p345, %p346
      %p348 = scmp.ne.s32.totalorder %s336, %s337
      %p349 = scmp.eq.s32.totalorder %s35, 1
      %p350 = por %p348, %p349
      %p352 = scmp.ne.s32.totalorder %s337, %s351
      %p353 = scmp.eq.s32.totalorder %s35, 0
      %p354 = por %p352, %p353
      %s356 = sadd.s32 %s355, 1
      %p359 = scmp.eq.s32.totalorder %s29, 1
      %p360 = scmp.ne.s32.totalorder %s355, %s357
      %p361 = scmp.eq.s32.totalorder %s29, 0
      %p362 = por %p360, %p361
      %p363 = scmp.ne.s32.totalorder %s355, %s357
      %p364 = scmp.eq.s32.totalorder %s34, 1
      %p365 = por %p363, %p364
      %p366 = scmp.ne.s32.totalorder %s357, %s358
      %p367 = scmp.eq.s32.totalorder %s34, 0
      %p368 = por %p366, %p367
      %p369 = scmp.ne.s32.totalorder %s357, %s358
      %p370 = scmp.eq.s32.totalorder %s35, 1
      %p371 = por %p369, %p370
      %p373 = scmp.ne.s32.totalorder %s358, %s372
      %p374 = scmp.eq.s32.totalorder %s35, 0
      %p375 = por %p373, %p374
      %s377 = sadd.s32 %s376, 1
      %p380 = scmp.eq.s32.totalorder %s29, 1
      %p381 = scmp.ne.s32.totalorder %s376, %s378
      %p382 = scmp.eq.s32.totalorder %s29, 0
      %p383 = por %p381, %p382
      %p384 = scmp.ne.s32.totalorder %s376, %s378
      %p385 = scmp.eq.s32.totalorder %s34, 1
      %p386 = por %p384, %p385
      %p387 = scmp.ne.s32.totalorder %s378, %s379
      %p388 = scmp.eq.s32.totalorder %s34, 0
      %p389 = por %p387, %p388
      %p390 = scmp.ne.s32.totalorder %s378, %s379
      %p391 = scmp.eq.s32.totalorder %s35, 1
      %p392 = por %p390, %p391
      %p394 = scmp.ne.s32.totalorder %s379, %s393
      %p395 = scmp.eq.s32.totalorder %s35, 0
      %p396 = por %p394, %p395
      %s398 = sadd.s32 %s397, 1
      %p401 = scmp.eq.s32.totalorder %s29, 1
      %p402 = scmp.ne.s32.totalorder %s397, %s399
      %p403 = scmp.eq.s32.totalorder %s29, 0
      %p404 = por %p402, %p403
      %p405 = scmp.ne.s32.totalorder %s397, %s399
      %p406 = scmp.eq.s32.totalorder %s34, 1
      %p407 = por %p405, %p406
      %p408 = scmp.ne.s32.totalorder %s399, %s400
      %p409 = scmp.eq.s32.totalorder %s34, 0
      %p410 = por %p408, %p409
      %p411 = scmp.ne.s32.totalorder %s399, %s400
      %p412 = scmp.eq.s32.totalorder %s35, 1
      %p413 = por %p411, %p412
      %p415 = scmp.ne.s32.totalorder %s400, %s414
      %p416 = scmp.eq.s32.totalorder %s35, 0
      %p417 = por %p415, %p416
      %s419 = sadd.s32 %s418, 1
      %p422 = scmp.eq.s32.totalorder %s29, 1
      %p423 = scmp.ne.s32.totalorder %s418, %s420
      %p424 = scmp.eq.s32.totalorder %s29, 0
      %p425 = por %p423, %p424
      %p426 = scmp.ne.s32.totalorder %s418, %s420
      %p427 = scmp.eq.s32.totalorder %s34, 1
      %p428 = por %p426, %p427
      %p429 = scmp.ne.s32.totalorder %s420, %s421
      %p430 = scmp.eq.s32.totalorder %s34, 0
      %p431 = por %p429, %p430
      %p432 = scmp.ne.s32.totalorder %s420, %s421
      %p433 = scmp.eq.s32.totalorder %s35, 1
      %p434 = por %p432, %p433
      %p436 = scmp.ne.s32.totalorder %s421, %s435
      %p437 = scmp.eq.s32.totalorder %s35, 0
      %p438 = por %p436, %p437
      %s439 = ssub.s32 %s36, %s48
      %s440 = ssub.s32 %s37, %s44
      %s441 = sor.u32 %s439, %s440
      %p442 = scmp.eq.s32.totalorder %s441, 0
      %s444 = sadd.s32 %s443, 1
      %s445 = scalar_select %p442, %s443, %s444
      %p448 = pneg %p442
      %p449 = scmp.eq.s32.totalorder %s29, 1
      %p450 = por %p448, %p449
      %p451 = scmp.ne.s32.totalorder %s443, %s446
      %p452 = scmp.eq.s32.totalorder %s29, 0
      %p453 = por %p451, %p452
      %p454 = scmp.ne.s32.totalorder %s443, %s446
      %p455 = scmp.eq.s32.totalorder %s34, 1
      %p456 = por %p454, %p455
      %p457 = scmp.ne.s32.totalorder %s446, %s447
      %p458 = scmp.eq.s32.totalorder %s34, 0
      %p459 = por %p457, %p458
      %p460 = scmp.ne.s32.totalorder %s446, %s447
      %p461 = scmp.eq.s32.totalorder %s35, 1
      %p462 = por %p460, %p461
      %p464 = scmp.ne.s32.totalorder %s447, %s463
      %p465 = scmp.eq.s32.totalorder %s35, 0
      %p466 = por %p464, %p465
      %p467 = scmp.le.s32.totalorder 1, %s29
      %p468 = scmp.lt.s32.totalorder %s29, 3
      %p469 = pnand %p467, %p468
      %p470 = pneg %p469
      // Predicated region
      $region9: #{tpu_custom_call.1} parent=5 // pred_check
        _
      $region10: #{tpu_custom_call.1} parent=5 // pred_check_branch
        %472 = sbr.rel (%p469) target = $region12
      $region11: #{tpu_custom_call.1} parent=5 // pred_region
        %s473 = ssub.s32 %s29, 1
        // Predicated region
        $region13: #{tpu_custom_call.1} parent=11 // pred_check
          %p474 = pneg %p116
        $region14: #{tpu_custom_call.1} parent=11 // pred_check_branch
          %476 = sbr.rel (%p474) target = $region16
        $region15: #{tpu_custom_call.1} parent=11 // pred_region
          _
        $region16: #{tpu_custom_call.1} parent=11 // pred_fallthru
          _
        // Predicated region
        $region17: #{tpu_custom_call.1} parent=11 // pred_check
          %p477 = pneg %p137
        $region18: #{tpu_custom_call.1} parent=11 // pred_check_branch
          %479 = sbr.rel (%p477) target = $region20
        $region19: #{tpu_custom_call.1} parent=11 // pred_region
          _
        $region20: #{tpu_custom_call.1} parent=11 // pred_fallthru
          _
        // Predicated region
        $region21: #{tpu_custom_call.1} parent=11 // pred_check
          %p480 = pneg %p158
        $region22: #{tpu_custom_call.1} parent=11 // pred_check_branch
          %482 = sbr.rel (%p480) target = $region24
        $region23: #{tpu_custom_call.1} parent=11 // pred_region
          _
        $region24: #{tpu_custom_call.1} parent=11 // pred_fallthru
          _
        // Predicated region
        $region25: #{tpu_custom_call.1} parent=11 // pred_check
          %p483 = pneg %p179
        $region26: #{tpu_custom_call.1} parent=11 // pred_check_branch
          %485 = sbr.rel (%p483) target = $region28
        $region27: #{tpu_custom_call.1} parent=11 // pred_region
          _
        $region28: #{tpu_custom_call.1} parent=11 // pred_fallthru
          _
        // Predicated region
        $region29: #{tpu_custom_call.1} parent=11 // pred_check
          %p486 = pneg %p200
        $region30: #{tpu_custom_call.1} parent=11 // pred_check_branch
          %488 = sbr.rel (%p486) target = $region32
        $region31: #{tpu_custom_call.1} parent=11 // pred_region
          _
        $region32: #{tpu_custom_call.1} parent=11 // pred_fallthru
          _
        // Predicated region
        $region33: #{tpu_custom_call.1} parent=11 // pred_check
          %p489 = pneg %p221
        $region34: #{tpu_custom_call.1} parent=11 // pred_check_branch
          %491 = sbr.rel (%p489) target = $region36
        $region35: #{tpu_custom_call.1} parent=11 // pred_region
          _
        $region36: #{tpu_custom_call.1} parent=11 // pred_fallthru
          _
        // Predicated region
        $region37: #{tpu_custom_call.1} parent=11 // pred_check
          %p492 = pneg %p242
        $region38: #{tpu_custom_call.1} parent=11 // pred_check_branch
          %494 = sbr.rel (%p492) target = $region40
        $region39: #{tpu_custom_call.1} parent=11 // pred_region
          _
        $region40: #{tpu_custom_call.1} parent=11 // pred_fallthru
          _
        // Predicated region
        $region41: #{tpu_custom_call.1} parent=11 // pred_check
          %p495 = pneg %p263
        $region42: #{tpu_custom_call.1} parent=11 // pred_check_branch
          %497 = sbr.rel (%p495) target = $region44
        $region43: #{tpu_custom_call.1} parent=11 // pred_region
          _
        $region44: #{tpu_custom_call.1} parent=11 // pred_fallthru
          _
        // Predicated region
        $region45: #{tpu_custom_call.1} parent=11 // pred_check
          %p498 = pneg %p284
        $region46: #{tpu_custom_call.1} parent=11 // pred_check_branch
          %500 = sbr.rel (%p498) target = $region48
        $region47: #{tpu_custom_call.1} parent=11 // pred_region
          %502 = vsyncadd [#allocation6], 0
          %s503 = sshll.u32 %s10, 4
          %s504 = int_to_ptr.hbm [resolvable:$true] %s503
          %s505 = sshll.u32 [#allocation5], 4
          %s506 = int_to_ptr.vmem [resolvable:$true] %s505
          %511 = dma.hbm_to_vmem [thread:$0]  %s504, 256, %s506, [#allocation6], 64, 64, 4
        $region48: #{tpu_custom_call.1} parent=11 // pred_fallthru
          _
        // Predicated region
        $region49: #{tpu_custom_call.1} parent=11 // pred_check
          %p512 = pneg %p305
        $region50: #{tpu_custom_call.1} parent=11 // pred_check_branch
          %514 = sbr.rel (%p512) target = $region52
        $region51: #{tpu_custom_call.1} parent=11 // pred_region
          _
        $region52: #{tpu_custom_call.1} parent=11 // pred_fallthru
          _
        // Predicated region
        $region53: #{tpu_custom_call.1} parent=11 // pred_check
          %p515 = pneg %p326
        $region54: #{tpu_custom_call.1} parent=11 // pred_check_branch
          %517 = sbr.rel (%p515) target = $region56
        $region55: #{tpu_custom_call.1} parent=11 // pred_region
          _
        $region56: #{tpu_custom_call.1} parent=11 // pred_fallthru
          _
        // Predicated region
        $region57: #{tpu_custom_call.1} parent=11 // pred_check
          %p518 = pneg %p347
        $region58: #{tpu_custom_call.1} parent=11 // pred_check_branch
          %520 = sbr.rel (%p518) target = $region60
        $region59: #{tpu_custom_call.1} parent=11 // pred_region
          _
        $region60: #{tpu_custom_call.1} parent=11 // pred_fallthru
          _
        // Predicated region
        $region61: #{tpu_custom_call.1} parent=11 // pred_check
          %p521 = pneg %p368
        $region62: #{tpu_custom_call.1} parent=11 // pred_check_branch
          %523 = sbr.rel (%p521) target = $region64
        $region63: #{tpu_custom_call.1} parent=11 // pred_region
          %525 = vsyncadd [#allocation9], 0
          %s526 = sshll.u32 %s14, 4
          %s527 = int_to_ptr.hbm [resolvable:$true] %s526
          %s528 = sshll.u32 [#allocation8], 4
          %s529 = int_to_ptr.vmem [resolvable:$true] %s528
          %534 = dma.hbm_to_vmem [thread:$0]  %s527, 256, %s529, [#allocation9], 64, 64, 4
        $region64: #{tpu_custom_call.1} parent=11 // pred_fallthru
          _
        // Predicated region
        $region65: #{tpu_custom_call.1} parent=11 // pred_check
          %p535 = pneg %p389
        $region66: #{tpu_custom_call.1} parent=11 // pred_check_branch
          %537 = sbr.rel (%p535) target = $region68
        $region67: #{tpu_custom_call.1} parent=11 // pred_region
          _
        $region68: #{tpu_custom_call.1} parent=11 // pred_fallthru
          _
        // Predicated region
        $region69: #{tpu_custom_call.1} parent=11 // pred_check
          %p538 = pneg %p410
        $region70: #{tpu_custom_call.1} parent=11 // pred_check_branch
          %540 = sbr.rel (%p538) target = $region72
        $region71: #{tpu_custom_call.1} parent=11 // pred_region
          _
        $region72: #{tpu_custom_call.1} parent=11 // pred_fallthru
          _
        // Predicated region
        $region73: #{tpu_custom_call.1} parent=11 // pred_check
          %p541 = pneg %p431
        $region74: #{tpu_custom_call.1} parent=11 // pred_check_branch
          %543 = sbr.rel (%p541) target = $region76
        $region75: #{tpu_custom_call.1} parent=11 // pred_region
          _
        $region76: #{tpu_custom_call.1} parent=11 // pred_fallthru
          _
      $region12: #{tpu_custom_call.1} parent=5 // pred_fallthru
        _
      %p544 = scmp.lt.s32.totalorder %s29, 2
      // Predicated region
      $region77: #{tpu_custom_call.1} parent=5 // pred_check
        %p545 = pneg %p544
      $region78: #{tpu_custom_call.1} parent=5 // pred_check_branch
        %547 = sbr.rel (%p545) target = $region80
      $region79: #{tpu_custom_call.1} parent=5 // pred_region
        // Predicated region
        $region81: #{tpu_custom_call.1} parent=79 // pred_check
          %p548 = pneg %p61
        $region82: #{tpu_custom_call.1} parent=79 // pred_check_branch
          %550 = sbr.rel (%p548) target = $region84
        $region83: #{tpu_custom_call.1} parent=79 // pred_region
          %p551 = scmp.lt.s32.totalorder %s36, 1
          %s552 = scalar_select %p551, %s36, 1
          %s553 = smul.addr %s552, 8
          %s554 = scalar_lea.vmem %s0, %s553
        $region84: #{tpu_custom_call.1} parent=79 // pred_fallthru
          _
        // Predicated region
        $region85: #{tpu_custom_call.1} parent=79 // pred_check
          %p555 = pneg %p89
        $region86: #{tpu_custom_call.1} parent=79 // pred_check_branch
          %557 = sbr.rel (%p555) target = $region88
        $region87: #{tpu_custom_call.1} parent=79 // pred_region
          %p558 = scmp.lt.s32.totalorder %s36, 1
          %s559 = scalar_select %p558, %s36, 1
          %p560 = scmp.lt.s32.totalorder %s37, 0
          %s561 = scalar_select %p560, %s37, 0
          %s562 = sadd.s32 %s561, %s559
          %s563 = smul.addr %s562, 8
          %s564 = scalar_lea.vmem %s1, %s563
        $region88: #{tpu_custom_call.1} parent=79 // pred_fallthru
          _
      $region80: #{tpu_custom_call.1} parent=5 // pred_fallthru
        _
      %p565 = scmp.le.s32.totalorder 1, %s29
      %p566 = scmp.lt.s32.totalorder %s29, 3
      %p567 = pnand %p565, %p566
      %p568 = pneg %p567
      // Predicated region
      $region89: #{tpu_custom_call.1} parent=5 // pred_check
        _
      $region90: #{tpu_custom_call.1} parent=5 // pred_check_branch
        %570 = sbr.rel (%p567) target = $region92
      $region91: #{tpu_custom_call.1} parent=5 // pred_region
        %s571 = ssub.s32 %s29, 1
        // Predicated region
        $region93: #{tpu_custom_call.1} parent=91 // pred_check
          %p572 = pneg %p284
        $region94: #{tpu_custom_call.1} parent=91 // pred_check_branch
          %574 = sbr.rel (%p572) target = $region96
        $region95: #{tpu_custom_call.1} parent=91 // pred_region
          %576 = dma.done [#allocation6], 256
        $region96: #{tpu_custom_call.1} parent=91 // pred_fallthru
          _
        // Predicated region
        $region97: #{tpu_custom_call.1} parent=91 // pred_check
          %p577 = pneg %p368
        $region98: #{tpu_custom_call.1} parent=91 // pred_check_branch
          %579 = sbr.rel (%p577) target = $region100
        $region99: #{tpu_custom_call.1} parent=91 // pred_region
          %581 = dma.done [#allocation9], 256
        $region100: #{tpu_custom_call.1} parent=91 // pred_fallthru
          _
        %p582 = scmp.lt.s32.totalorder %s38, 1
        %s583 = scalar_select %p582, %s38, 1
        %s584 = smul.addr %s583, 8
        %s585 = scalar_lea.vmem %s0, %s584
        %p586 = pneg %p67
        %p587 = pneg %p64
        %p588 = scmp.lt.s32.totalorder %s38, 1
        %s589 = scalar_select %p588, %s38, 1
        %p590 = scmp.lt.s32.totalorder %s39, 0
        %s591 = scalar_select %p590, %s39, 0
        %s592 = sadd.s32 %s591, %s589
        %s593 = smul.addr %s592, 8
        %s594 = scalar_lea.vmem %s1, %s593
        %p595 = pneg %p95
        %p596 = pneg %p92
        %p597 = pneg %p116
        %p598 = pneg %p113
        %p599 = pneg %p137
        %p600 = pneg %p134
        %p601 = pneg %p158
        %p602 = pneg %p155
        %p603 = pneg %p179
        %p604 = pneg %p176
        %p605 = pneg %p200
        %p606 = pneg %p197
        %p607 = pneg %p221
        %p608 = pneg %p218
        %p609 = pneg %p242
        %p610 = pneg %p239
        %p611 = pneg %p263
        %p612 = pneg %p260
        %p613 = pneg %p284
        %p614 = pneg %p281
        %p615 = pneg %p305
        %p616 = pneg %p302
        %p617 = pneg %p326
        %p618 = pneg %p323
        %p619 = pneg %p347
        %p620 = pneg %p344
        %p621 = pneg %p368
        %p622 = pneg %p365
        %p623 = pneg %p389
        %p624 = pneg %p386
        %p625 = pneg %p410
        %p626 = pneg %p407
        %p627 = pneg %p431
        %p628 = pneg %p428
        %p629 = pneg %p459
        %p630 = pneg %p456
        %s631 = sand.u32 %s446, 1
        %s632 = scalar_lea.sflag [#allocation7], %s631
        %s633 = sand.u32 %s446, 1
        %s634 = smul.addr %s633, 8
        %s635 = scalar_lea.vmem [#allocation10], %s634
        %p636 = scmp.lt.s32.totalorder %s38, 1
        %s637 = scalar_select %p636, %s38, 1
        %s638 = smul.addr %s637, 8
        %s639 = scalar_lea.vmem %s0, %s638
        %p640 = scmp.lt.s32.totalorder %s38, 1
        %s641 = scalar_select %p640, %s38, 1
        %p642 = scmp.lt.s32.totalorder %s39, 0
        %s643 = scalar_select %p642, %s39, 0
        %s644 = sadd.s32 %s643, %s641
        %s645 = smul.addr %s644, 8
        %s646 = scalar_lea.vmem %s1, %s645
        %p648 = scmp.eq.s32.totalorder %s39, 0
        // Predicated region
        $region101: #{tpu_custom_call.1} parent=91 // pred_check
          %p649 = pneg %p648
        $region102: #{tpu_custom_call.1} parent=91 // pred_check_branch
          %651 = sbr.rel (%p649) target = $region104
        $region103: #{tpu_custom_call.1} parent=91 // pred_region
          %v652 = vld [vmem:[%s639] sm:$0xff]
          %v653 = vld [vmem:[%s2] sm:$0x1]
          %v654 = vld [vmem:[%s3] sm:$0x1]
          %vm655 = vcmask 261120
          %v656 = vsel %vm655, %v652, 0.0
          %657 = vadd.xlane.f32.xlu0 %v656
          %v658 = vpop.xlane.xlu0 %657
          %v659 = vrcp.pop 32.0
          %v660 = vmul.f32 32.0, %v659
          %v661 = vsub.f32 1.0, %v660
          %v662 = vmul.f32 %v659, %v661
          %v663 = vadd.f32 %v659, %v662
          %vm664 = vweird.f32 %v659
          %v665 = vsel %vm664, %v659, %v663
          %v666 = vmul.f32 %v658, %v665
          %v667 = vsub.f32 %v652, %v666
          %v668 = vmul.f32 %v667, %v667
          %v669 = vsel %vm655, %v668, 0.0
          %670 = vadd.xlane.f32.xlu0 %v669
          %v671 = vpop.xlane.xlu0 %670
          %v672 = vmul.f32 %v671, %v665
          %v673 = vadd.f32 %v672, 1e-05
          %v674 = vrsqrt.pop %v673
          %v675 = vmul.f32 %v674, %v673
          %v676 = vmul.f32 %v675, %v674
          %v677 = vmul.f32 0.5, %v676
          %v678 = vsub.f32 1.5, %v677
          %v679 = vmul.f32 %v674, %v678
          %vm680 = vweird.f32 %v673
          %vm681 = vweird.f32 %v674
          %vm682 = vmor %vm680, %vm681
          %v683 = vsel %vm682, %v674, %v679
          %v684 = vmul.f32 %v667, %v683
          %v686 = vperm.slane %v653, 0
          %v688 = vmul.f32 %v684, %v686
          %v690 = vperm.slane %v654, 0
          %v692 = vadd.f32 %v688, %v690
          %v693 = vpack.c.bf16 %v692, %v692
          %v694 = vld [vmem:[%s4] sm:$0xf]
          %v695 = vld [vmem:[%s4 + $0x4] sm:$0xf]
          %v696 = vld [vmem:[%s4 + $0x8] sm:$0xf]
          %v697 = vld [vmem:[%s4 + $0xc] sm:$0xf]
          %v698 = vld [vmem:[%s5] sm:$0x1]
          %v700 = vperm.slane %v698, 0
          %v706 = vunpack.c.l.b16 %v694
          %v707 = vunpack.c.l.b16 %v695
          %v708 = vunpack.c.l.b16 %v696
          %v709 = vunpack.c.l.b16 %v697
          %v710 = vpack.c.b16 %v707, %v706
          %v711 = vpack.c.b16 %v709, %v708
          %v715 = vsel %vm655, %v693, 0
          %717 = vmatpush.bf16.msra.mxu0 0
          %718 = vmatpush.bf16.msra.mxu0 0
          %719 = vmatpush.bf16.msra.mxu0 0
          %720 = vmatpush.bf16.msra.mxu0 0
          %721 = vmatpush.bf16.msra.mxu0 0
          %722 = vmatpush.bf16.msra.mxu0 0
          %723 = vmatpush.bf16.msra.mxu0 %v711
          %724 = vmatpush.bf16.msra.mxu0 %v710
          %725 = vmatmul.bf16.gmra.mxu0 %v715
          %v726 = vpop.f32.mrf.mxu0
          %v727 = vadd.f32 %v700, %v726
          %v728 = vpop.f32.mrf.mxu0
          %729 = vdwg.mxu0
          %v730 = vmul.f32 %v727, 0.35355338
          %v731 = vld [vmem:[%s6] sm:$0xf]
          %v732 = vld [vmem:[%s6 + $0x4] sm:$0xf]
          %v733 = vld [vmem:[%s6 + $0x8] sm:$0xf]
          %v734 = vld [vmem:[%s6 + $0xc] sm:$0xf]
          %v735 = vld [vmem:[%s7] sm:$0x1]
          %v737 = vperm.slane %v735, 0
          %v743 = vunpack.c.l.b16 %v731
          %v744 = vunpack.c.l.b16 %v732
          %v745 = vunpack.c.l.b16 %v733
          %v746 = vunpack.c.l.b16 %v734
          %v747 = vpack.c.b16 %v744, %v743
          %v748 = vpack.c.b16 %v746, %v745
          %751 = vmatpush.bf16.msra.mxu0 0
          %752 = vmatpush.bf16.msra.mxu0 0
          %753 = vmatpush.bf16.msra.mxu0 0
          %754 = vmatpush.bf16.msra.mxu0 0
          %755 = vmatpush.bf16.msra.mxu0 0
          %756 = vmatpush.bf16.msra.mxu0 0
          %757 = vmatpush.bf16.msra.mxu0 %v748
          %758 = vmatpush.bf16.msra.mxu0 %v747
          %759 = vmatmul.bf16.gmra.mxu0 %v715
          %v760 = vpop.f32.mrf.mxu0
          %v761 = vadd.f32 %v737, %v760
          %v762 = vpop.f32.mrf.mxu0
          %763 = vdwg.mxu0
          %v764 = vld [vmem:[%s8] sm:$0xf]
          %v765 = vld [vmem:[%s8 + $0x4] sm:$0xf]
          %v766 = vld [vmem:[%s8 + $0x8] sm:$0xf]
          %v767 = vld [vmem:[%s8 + $0xc] sm:$0xf]
          %v768 = vld [vmem:[%s9] sm:$0x1]
          %v770 = vperm.slane %v768, 0
          %v776 = vunpack.c.l.b16 %v764
          %v777 = vunpack.c.l.b16 %v765
          %v778 = vunpack.c.l.b16 %v766
          %v779 = vunpack.c.l.b16 %v767
          %v780 = vpack.c.b16 %v777, %v776
          %v781 = vpack.c.b16 %v779, %v778
          %784 = vmatpush.bf16.msra.mxu0 0
          %785 = vmatpush.bf16.msra.mxu0 0
          %786 = vmatpush.bf16.msra.mxu0 0
          %787 = vmatpush.bf16.msra.mxu0 0
          %788 = vmatpush.bf16.msra.mxu0 0
          %789 = vmatpush.bf16.msra.mxu0 0
          %790 = vmatpush.bf16.msra.mxu0 %v781
          %791 = vmatpush.bf16.msra.mxu0 %v780
          %792 = vmatmul.bf16.gmra.mxu0 %v715
          %v793 = vpop.f32.mrf.mxu0
          %v794 = vadd.f32 %v770, %v793
          %v795 = vpop.f32.mrf.mxu0
          %796 = vdwg.mxu0
          %v797 = vpack.c.bf16 %v730, %v730
          %vm798 = vcmask 60416
          %799 = vst.msk [vmem:[#allocation2] sm:$0xf] %vm798, %v797
          %v800 = vpack.c.bf16 %v761, %v761
          %801 = vst.msk [vmem:[#allocation3] sm:$0xf] %vm798, %v800
          %v802 = vpack.c.bf16 %v794, %v794
          %803 = vst.msk [vmem:[#allocation4] sm:$0xf] %vm798, %v802
          %805 = vrot.lane.b32.xlu0 %v797, 120
          %v806 = vpop.permute.xlu0 %805
          %s808 = scalar_lea.vmem [#allocation2], 4
          %809 = vst.msk [vmem:[%s808] sm:$0xf] %vm798, %v806
          %811 = vrot.lane.b32.xlu0 %v800, 120
          %v812 = vpop.permute.xlu0 %811
          %s814 = scalar_lea.vmem [#allocation3], 4
          %815 = vst.msk [vmem:[%s814] sm:$0xf] %vm798, %v812
          %817 = vrot.lane.b32.xlu0 %v802, 120
          %v818 = vpop.permute.xlu0 %817
          %s820 = scalar_lea.vmem [#allocation4], 4
          %821 = vst.msk [vmem:[%s820] sm:$0xf] %vm798, %v818
          %822 = vrot.lane.b32.xlu0 %v797, 112
          %v823 = vpop.permute.xlu0 %822
          %s825 = scalar_lea.vmem [#allocation2], 8
          %826 = vst.msk [vmem:[%s825] sm:$0xf] %vm798, %v823
          %827 = vrot.lane.b32.xlu0 %v800, 112
          %v828 = vpop.permute.xlu0 %827
          %s830 = scalar_lea.vmem [#allocation3], 8
          %831 = vst.msk [vmem:[%s830] sm:$0xf] %vm798, %v828
          %832 = vrot.lane.b32.xlu0 %v802, 112
          %v833 = vpop.permute.xlu0 %832
          %s835 = scalar_lea.vmem [#allocation4], 8
          %836 = vst.msk [vmem:[%s835] sm:$0xf] %vm798, %v833
          %837 = vrot.lane.b32.xlu0 %v797, 104
          %v838 = vpop.permute.xlu0 %837
          %s840 = scalar_lea.vmem [#allocation2], 12
          %841 = vst.msk [vmem:[%s840] sm:$0xf] %vm798, %v838
          %842 = vrot.lane.b32.xlu0 %v800, 104
          %v843 = vpop.permute.xlu0 %842
          %s845 = scalar_lea.vmem [#allocation3], 12
          %846 = vst.msk [vmem:[%s845] sm:$0xf] %vm798, %v843
          %847 = vrot.lane.b32.xlu0 %v802, 104
          %v848 = vpop.permute.xlu0 %847
          %s850 = scalar_lea.vmem [#allocation4], 12
          %851 = vst.msk [vmem:[%s850] sm:$0xf] %vm798, %v848
        $region104: #{tpu_custom_call.1} parent=91 // pred_fallthru
          _
        %s852 = smul.u32 %s39, 8
        %s853 = sshra.s32 %s852, 3
        %s854 = sand.u32 %s852, 7
        %s855 = smul.addr %s853, 4
        %s856 = scalar_lea.vmem [#allocation2], %s855
        %v857 = vld [vmem:[%s856] sm:$0xf]
        %v858 = vld [vmem:[%s856 + $0x4] sm:$0xf]
        %v859 = vld [vmem:[%s856 + $0x8] sm:$0xf]
        %v860 = vld [vmem:[%s856 + $0xc] sm:$0xf]
        %v861 = vlaneseq
        %v862 = vshrl.u32 %v861, 7
        %v863 = vlaneseq
        %v864 = vand.u32 %v863, 127
        %vm865 = vcmp.le.s32.totalorder %v864, %v862
        %s866 = sadd.s32 %s39, 1
        // While loop
        $region105: #{tpu_custom_call.1} parent=91 // loop_pre_header
          _
        $region106: #{tpu_custom_call.1} parent=91 // loop_header
          %s868 = sphi 0, %s870
          %p869 = scmp.ge.s32.totalorder %s868, %s866
          %v873 = vphi -1e+30, %v1000
          %v874 = vphi -1e+30, %v1001
          %v875 = vphi -1e+30, %v1002
          %v876 = vphi -1e+30, %v1003
          %v877 = vphi 0.0, %v1044
          %v878 = vphi 0.0, %v1045
          %v879 = vphi 0.0, %v1046
          %v880 = vphi 0.0, %v1047
          %v881 = vphi 0.0, %v1133
          %v882 = vphi 0.0, %v1134
          %v883 = vphi 0.0, %v1135
          %v884 = vphi 0.0, %v1136
        $region107: #{tpu_custom_call.1} parent=91 // loop_header_branch
          %872 = sbr.rel (%p869) target = $region111
        $region108: #{tpu_custom_call.1} parent=91 // loop_body
          %s885 = smul.u32 %s868, 8
          %s886 = sshra.s32 %s885, 3
          %s887 = sand.u32 %s885, 7
          %s888 = smul.addr %s886, 4
          %s889 = scalar_lea.vmem [#allocation3], %s888
          %v890 = vld [vmem:[%s889] sm:$0xf]
          %v891 = vld [vmem:[%s889 + $0x4] sm:$0xf]
          %v892 = vld [vmem:[%s889 + $0x8] sm:$0xf]
          %v893 = vld [vmem:[%s889 + $0xc] sm:$0xf]
          %s894 = smul.addr %s886, 4
          %s895 = scalar_lea.vmem [#allocation4], %s894
          %v896 = vld [vmem:[%s895] sm:$0xf]
          %v897 = vld [vmem:[%s895 + $0x4] sm:$0xf]
          %v898 = vld [vmem:[%s895 + $0x8] sm:$0xf]
          %v899 = vld [vmem:[%s895 + $0xc] sm:$0xf]
          %vm900 = vcmask 64512
          %v902 = vsel %vm900, %v857, 0
          %v905 = vsel %vm900, %v890, 0
          %907 = vmatpush.bf16.xpose.msra.mxu0 0
          %908 = vmatpush.bf16.xpose.msra.mxu0 0
          %909 = vmatpush.bf16.xpose.msra.mxu0 0
          %910 = vmatpush.bf16.xpose.msra.mxu0 0
          %911 = vmatpush.bf16.xpose.msra.mxu0 0
          %912 = vmatpush.bf16.xpose.msra.mxu0 0
          %913 = vmatpush.bf16.xpose.msra.mxu0 0
          %914 = vmatpush.bf16.xpose.msra.mxu0 %v905
          %915 = vmatmul.bf16.gmra.mxu0 %v902
          %v916 = vpop.f32.mrf.mxu0
          %v917 = vadd.f32 0.0, %v916
          %v918 = vpop.f32.mrf.mxu0
          %919 = vdwg.mxu0
          %v921 = vsel %vm900, %v858, 0
          %v924 = vsel %vm900, %v891, 0
          %926 = vmatpush.bf16.xpose.msra.mxu0 0
          %927 = vmatpush.bf16.xpose.msra.mxu0 0
          %928 = vmatpush.bf16.xpose.msra.mxu0 0
          %929 = vmatpush.bf16.xpose.msra.mxu0 0
          %930 = vmatpush.bf16.xpose.msra.mxu0 0
          %931 = vmatpush.bf16.xpose.msra.mxu0 0
          %932 = vmatpush.bf16.xpose.msra.mxu0 0
          %933 = vmatpush.bf16.xpose.msra.mxu0 %v924
          %934 = vmatmul.bf16.gmra.mxu0 %v921
          %v935 = vpop.f32.mrf.mxu0
          %v936 = vadd.f32 0.0, %v935
          %v937 = vpop.f32.mrf.mxu0
          %938 = vdwg.mxu0
          %v940 = vsel %vm900, %v859, 0
          %v943 = vsel %vm900, %v892, 0
          %945 = vmatpush.bf16.xpose.msra.mxu0 0
          %946 = vmatpush.bf16.xpose.msra.mxu0 0
          %947 = vmatpush.bf16.xpose.msra.mxu0 0
          %948 = vmatpush.bf16.xpose.msra.mxu0 0
          %949 = vmatpush.bf16.xpose.msra.mxu0 0
          %950 = vmatpush.bf16.xpose.msra.mxu0 0
          %951 = vmatpush.bf16.xpose.msra.mxu0 0
          %952 = vmatpush.bf16.xpose.msra.mxu0 %v943
          %953 = vmatmul.bf16.gmra.mxu0 %v940
          %v954 = vpop.f32.mrf.mxu0
          %v955 = vadd.f32 0.0, %v954
          %v956 = vpop.f32.mrf.mxu0
          %957 = vdwg.mxu0
          %v959 = vsel %vm900, %v860, 0
          %v962 = vsel %vm900, %v893, 0
          %964 = vmatpush.bf16.xpose.msra.mxu0 0
          %965 = vmatpush.bf16.xpose.msra.mxu0 0
          %966 = vmatpush.bf16.xpose.msra.mxu0 0
          %967 = vmatpush.bf16.xpose.msra.mxu0 0
          %968 = vmatpush.bf16.xpose.msra.mxu0 0
          %969 = vmatpush.bf16.xpose.msra.mxu0 0
          %970 = vmatpush.bf16.xpose.msra.mxu0 0
          %971 = vmatpush.bf16.xpose.msra.mxu0 %v962
          %972 = vmatmul.bf16.gmra.mxu0 %v959
          %v973 = vpop.f32.mrf.mxu0
          %v974 = vadd.f32 0.0, %v973
          %v975 = vpop.f32.mrf.mxu0
          %976 = vdwg.mxu0
          %p977 = scmp.lt.s32.totalorder %s868, %s39
          %s978 = scalar_select %p977, 1, 0
          %v979 = vstv %s978
          %vm980 = vcmp.eq.s32.totalorder %v979, 1
          %vm981 = vmor %vm980, %vm865
          %v982 = vsel %vm981, 1, 0
          %vm983 = vcmp.eq.s32.totalorder %v982, 1
          %v984 = vsel %vm983, %v917, -1e+30
          %v985 = vsel %vm983, %v936, -1e+30
          %v986 = vsel %vm983, %v955, -1e+30
          %v987 = vsel %vm983, %v974, -1e+30
          %v988 = vsel %vm900, %v984, -inf
          %989 = vmax.xlane.f32.xlu0 %v988
          %v990 = vpop.xlane.xlu0 %989
          %v991 = vsel %vm900, %v985, -inf
          %992 = vmax.xlane.f32.xlu0 %v991
          %v993 = vpop.xlane.xlu0 %992
          %v994 = vsel %vm900, %v986, -inf
          %995 = vmax.xlane.f32.xlu0 %v994
          %v996 = vpop.xlane.xlu0 %995
          %v997 = vsel %vm900, %v987, -inf
          %998 = vmax.xlane.f32.xlu0 %v997
          %v999 = vpop.xlane.xlu0 %998
          %v1000 = vmax.f32 %v873, %v990
          %v1001 = vmax.f32 %v874, %v993
          %v1002 = vmax.f32 %v875, %v996
          %v1003 = vmax.f32 %v876, %v999
          %v1004 = vsub.f32 %v873, %v1000
          %v1005 = vsub.f32 %v874, %v1001
          %v1006 = vsub.f32 %v875, %v1002
          %v1007 = vsub.f32 %v876, %v1003
          %v1008 = vmul.f32 %v1004, 1.442695
          %v1009 = vpow.pop %v1008
          %v1010 = vmul.f32 %v1005, 1.442695
          %v1011 = vpow.pop %v1010
          %v1012 = vmul.f32 %v1006, 1.442695
          %v1013 = vpow.pop %v1012
          %v1014 = vmul.f32 %v1007, 1.442695
          %v1015 = vpow.pop %v1014
          %v1016 = vsub.f32 %v984, %v1000
          %v1017 = vsub.f32 %v985, %v1001
          %v1018 = vsub.f32 %v986, %v1002
          %v1019 = vsub.f32 %v987, %v1003
          %v1020 = vmul.f32 %v1016, 1.442695
          %v1021 = vpow.pop %v1020
          %v1022 = vmul.f32 %v1017, 1.442695
          %v1023 = vpow.pop %v1022
          %v1024 = vmul.f32 %v1018, 1.442695
          %v1025 = vpow.pop %v1024
          %v1026 = vmul.f32 %v1019, 1.442695
          %v1027 = vpow.pop %v1026
          %v1028 = vmul.f32 %v1009, %v877
          %v1029 = vmul.f32 %v1011, %v878
          %v1030 = vmul.f32 %v1013, %v879
          %v1031 = vmul.f32 %v1015, %v880
          %v1032 = vsel %vm900, %v1021, 0.0
          %1033 = vadd.xlane.f32.xlu0 %v1032
          %v1034 = vpop.xlane.xlu0 %1033
          %v1035 = vsel %vm900, %v1023, 0.0
          %1036 = vadd.xlane.f32.xlu0 %v1035
          %v1037 = vpop.xlane.xlu0 %1036
          %v1038 = vsel %vm900, %v1025, 0.0
          %1039 = vadd.xlane.f32.xlu0 %v1038
          %v1040 = vpop.xlane.xlu0 %1039
          %v1041 = vsel %vm900, %v1027, 0.0
          %1042 = vadd.xlane.f32.xlu0 %v1041
          %v1043 = vpop.xlane.xlu0 %1042
          %v1044 = vadd.f32 %v1028, %v1034
          %v1045 = vadd.f32 %v1029, %v1037
          %v1046 = vadd.f32 %v1030, %v1040
          %v1047 = vadd.f32 %v1031, %v1043
          %v1048 = vmul.f32 %v1009, %v881
          %v1049 = vmul.f32 %v1011, %v882
          %v1050 = vmul.f32 %v1013, %v883
          %v1051 = vmul.f32 %v1015, %v884
          %v1052 = vpack.c.bf16 %v1021, %v1021
          %v1053 = vpack.c.bf16 %v1023, %v1023
          %v1054 = vpack.c.bf16 %v1025, %v1025
          %v1055 = vpack.c.bf16 %v1027, %v1027
          %v1057 = vsel %vm900, %v1052, 0
          %vm1059 = vcmask 1043456
          %v1061 = vsel %vm1059, %v896, 0
          %1063 = vmatpush.bf16.msra.mxu0 0
          %1064 = vmatpush.bf16.msra.mxu0 0
          %1065 = vmatpush.bf16.msra.mxu0 0
          %1066 = vmatpush.bf16.msra.mxu0 0
          %1067 = vmatpush.bf16.msra.mxu0 0
          %1068 = vmatpush.bf16.msra.mxu0 0
          %1069 = vmatpush.bf16.msra.mxu0 0
          %1070 = vmatpush.bf16.msra.mxu0 %v1061
          %1071 = vmatmul.bf16.gmra.mxu0 %v1057
          %v1072 = vpop.f32.mrf.mxu0
          %v1073 = vadd.f32 0.0, %v1072
          %v1074 = vpop.f32.mrf.mxu0
          %1075 = vdwg.mxu0
          %v1077 = vsel %vm900, %v1053, 0
          %v1080 = vsel %vm1059, %v897, 0
          %1082 = vmatpush.bf16.msra.mxu0 0
          %1083 = vmatpush.bf16.msra.mxu0 0
          %1084 = vmatpush.bf16.msra.mxu0 0
          %1085 = vmatpush.bf16.msra.mxu0 0
          %1086 = vmatpush.bf16.msra.mxu0 0
          %1087 = vmatpush.bf16.msra.mxu0 0
          %1088 = vmatpush.bf16.msra.mxu0 0
          %1089 = vmatpush.bf16.msra.mxu0 %v1080
          %1090 = vmatmul.bf16.gmra.mxu0 %v1077
          %v1091 = vpop.f32.mrf.mxu0
          %v1092 = vadd.f32 0.0, %v1091
          %v1093 = vpop.f32.mrf.mxu0
          %1094 = vdwg.mxu0
          %v1096 = vsel %vm900, %v1054, 0
          %v1099 = vsel %vm1059, %v898, 0
          %1101 = vmatpush.bf16.msra.mxu0 0
          %1102 = vmatpush.bf16.msra.mxu0 0
          %1103 = vmatpush.bf16.msra.mxu0 0
          %1104 = vmatpush.bf16.msra.mxu0 0
          %1105 = vmatpush.bf16.msra.mxu0 0
          %1106 = vmatpush.bf16.msra.mxu0 0
          %1107 = vmatpush.bf16.msra.mxu0 0
          %1108 = vmatpush.bf16.msra.mxu0 %v1099
          %1109 = vmatmul.bf16.gmra.mxu0 %v1096
          %v1110 = vpop.f32.mrf.mxu0
          %v1111 = vadd.f32 0.0, %v1110
          %v1112 = vpop.f32.mrf.mxu0
          %1113 = vdwg.mxu0
          %v1115 = vsel %vm900, %v1055, 0
          %v1118 = vsel %vm1059, %v899, 0
          %1120 = vmatpush.bf16.msra.mxu0 0
          %1121 = vmatpush.bf16.msra.mxu0 0
          %1122 = vmatpush.bf16.msra.mxu0 0
          %1123 = vmatpush.bf16.msra.mxu0 0
          %1124 = vmatpush.bf16.msra.mxu0 0
          %1125 = vmatpush.bf16.msra.mxu0 0
          %1126 = vmatpush.bf16.msra.mxu0 0
          %1127 = vmatpush.bf16.msra.mxu0 %v1118
          %1128 = vmatmul.bf16.gmra.mxu0 %v1115
          %v1129 = vpop.f32.mrf.mxu0
          %v1130 = vadd.f32 0.0, %v1129
          %v1131 = vpop.f32.mrf.mxu0
          %1132 = vdwg.mxu0
          %v1133 = vadd.f32 %v1048, %v1073
          %v1134 = vadd.f32 %v1049, %v1092
          %v1135 = vadd.f32 %v1050, %v1111
          %v1136 = vadd.f32 %v1051, %v1130
        $region109: #{tpu_custom_call.1} parent=91 // loop_footer
          %s870 = sadd.s32 %s868, 1
        $region110: #{tpu_custom_call.1} parent=91 // loop_footer_branch
          %867 = sbr.rel target = $region106
        $region111: #{tpu_custom_call.1} parent=91 // loop_exit
          _
        %v1137 = vrcp.pop %v877
        %v1138 = vmul.f32 %v877, %v1137
        %v1139 = vsub.f32 1.0, %v1138
        %v1140 = vmul.f32 %v1137, %v1139
        %v1141 = vadd.f32 %v1137, %v1140
        %vm1142 = vweird.f32 %v877
        %vm1143 = vweird.f32 %v1137
        %vm1144 = vmor %vm1142, %vm1143
        %v1145 = vsel %vm1144, %v1137, %v1141
        %v1146 = vand.u32 2147483647, %v877
        %vm1147 = vcmp.eq.f32.partialorder %v1146, 8.507059e+37
        %v1148 = vand.u32 %v877, 2147483648
        %v1149 = vor.u32 1.1754944e-38, %v1148
        %v1150 = vsel %vm1147, %v1149, %v1145
        %v1151 = vmul.f32 %v881, %v1150
        %v1152 = vrcp.pop %v878
        %v1153 = vmul.f32 %v878, %v1152
        %v1154 = vsub.f32 1.0, %v1153
        %v1155 = vmul.f32 %v1152, %v1154
        %v1156 = vadd.f32 %v1152, %v1155
        %vm1157 = vweird.f32 %v878
        %vm1158 = vweird.f32 %v1152
        %vm1159 = vmor %vm1157, %vm1158
        %v1160 = vsel %vm1159, %v1152, %v1156
        %v1161 = vand.u32 2147483647, %v878
        %vm1162 = vcmp.eq.f32.partialorder %v1161, 8.507059e+37
        %v1163 = vand.u32 %v878, 2147483648
        %v1164 = vor.u32 1.1754944e-38, %v1163
        %v1165 = vsel %vm1162, %v1164, %v1160
        %v1166 = vmul.f32 %v882, %v1165
        %v1167 = vrcp.pop %v879
        %v1168 = vmul.f32 %v879, %v1167
        %v1169 = vsub.f32 1.0, %v1168
        %v1170 = vmul.f32 %v1167, %v1169
        %v1171 = vadd.f32 %v1167, %v1170
        %vm1172 = vweird.f32 %v879
        %vm1173 = vweird.f32 %v1167
        %vm1174 = vmor %vm1172, %vm1173
        %v1175 = vsel %vm1174, %v1167, %v1171
        %v1176 = vand.u32 2147483647, %v879
        %vm1177 = vcmp.eq.f32.partialorder %v1176, 8.507059e+37
        %v1178 = vand.u32 %v879, 2147483648
        %v1179 = vor.u32 1.1754944e-38, %v1178
        %v1180 = vsel %vm1177, %v1179, %v1175
        %v1181 = vmul.f32 %v883, %v1180
        %v1182 = vrcp.pop %v880
        %v1183 = vmul.f32 %v880, %v1182
        %v1184 = vsub.f32 1.0, %v1183
        %v1185 = vmul.f32 %v1182, %v1184
        %v1186 = vadd.f32 %v1182, %v1185
        %vm1187 = vweird.f32 %v880
        %vm1188 = vweird.f32 %v1182
        %vm1189 = vmor %vm1187, %vm1188
        %v1190 = vsel %vm1189, %v1182, %v1186
        %v1191 = vand.u32 2147483647, %v880
        %vm1192 = vcmp.eq.f32.partialorder %v1191, 8.507059e+37
        %v1193 = vand.u32 %v880, 2147483648
        %v1194 = vor.u32 1.1754944e-38, %v1193
        %v1195 = vsel %vm1192, %v1194, %v1190
        %v1196 = vmul.f32 %v884, %v1195
        %1198 = vrot.lane.b32.xlu0 %v1166, 8
        %v1199 = vpop.permute.xlu0 %1198
        %1202 = vrot.lane.b32.xlu0 %v1181, 16
        %v1203 = vpop.permute.xlu0 %1202
        %1206 = vrot.lane.b32.xlu0 %v1196, 24
        %v1207 = vpop.permute.xlu0 %1206
        %vm1209 = vcmask 64512
        %v1210 = vsel %vm1209, %v1151, %v1199
        %vm1211 = vcmask 130048
        %v1212 = vsel %vm1211, %v1210, %v1203
        %vm1213 = vcmask 195584
        %v1214 = vsel %vm1213, %v1212, %v1207
        %v1215 = vpack.c.bf16 %v1214, %v1214
        %v1216 = vld [vmem:[#allocation5] sm:$0xf]
        %v1217 = vld [vmem:[#allocation5 + $0x4] sm:$0xf]
        %v1218 = vld [vmem:[#allocation5 + $0x8] sm:$0xf]
        %v1219 = vld [vmem:[#allocation5 + $0xc] sm:$0xf]
        %v1220 = vld [vmem:[%s11] sm:$0x1]
        %v1222 = vperm.slane %v1220, 0
        %v1228 = vunpack.c.l.b16 %v1216
        %v1229 = vunpack.c.l.b16 %v1217
        %v1230 = vunpack.c.l.b16 %v1218
        %v1231 = vunpack.c.l.b16 %v1219
        %v1232 = vpack.c.b16 %v1229, %v1228
        %v1233 = vpack.c.b16 %v1231, %v1230
        %vm1236 = vcmask 261120
        %v1238 = vsel %vm1236, %v1215, 0
        %1240 = vmatpush.bf16.msra.mxu0 0
        %1241 = vmatpush.bf16.msra.mxu0 0
        %1242 = vmatpush.bf16.msra.mxu0 0
        %1243 = vmatpush.bf16.msra.mxu0 0
        %1244 = vmatpush.bf16.msra.mxu0 0
        %1245 = vmatpush.bf16.msra.mxu0 0
        %1246 = vmatpush.bf16.msra.mxu0 %v1233
        %1247 = vmatpush.bf16.msra.mxu0 %v1232
        %1248 = vmatmul.bf16.gmra.mxu0 %v1238
        %v1249 = vpop.f32.mrf.mxu0
        %v1250 = vadd.f32 %v1222, %v1249
        %v1251 = vpop.f32.mrf.mxu0
        %1252 = vdwg.mxu0
        %v1253 = vld [vmem:[%s646] sm:$0xff]
        %v1254 = vadd.f32 %v1253, %v1250
        %v1255 = vld [vmem:[%s12] sm:$0x1]
        %v1256 = vld [vmem:[%s13] sm:$0x1]
        %v1257 = vsel %vm1236, %v1254, 0.0
        %1258 = vadd.xlane.f32.xlu0 %v1257
        %v1259 = vpop.xlane.xlu0 %1258
        %v1260 = vrcp.pop 32.0
        %v1261 = vmul.f32 32.0, %v1260
        %v1262 = vsub.f32 1.0, %v1261
        %v1263 = vmul.f32 %v1260, %v1262
        %v1264 = vadd.f32 %v1260, %v1263
        %vm1265 = vweird.f32 %v1260
        %v1266 = vsel %vm1265, %v1260, %v1264
        %v1267 = vmul.f32 %v1259, %v1266
        %v1268 = vsub.f32 %v1254, %v1267
        %v1269 = vmul.f32 %v1268, %v1268
        %v1270 = vsel %vm1236, %v1269, 0.0
        %1271 = vadd.xlane.f32.xlu0 %v1270
        %v1272 = vpop.xlane.xlu0 %1271
        %v1273 = vmul.f32 %v1272, %v1266
        %v1274 = vadd.f32 %v1273, 1e-05
        %v1275 = vrsqrt.pop %v1274
        %v1276 = vmul.f32 %v1275, %v1274
        %v1277 = vmul.f32 %v1276, %v1275
        %v1278 = vmul.f32 0.5, %v1277
        %v1279 = vsub.f32 1.5, %v1278
        %v1280 = vmul.f32 %v1275, %v1279
        %vm1281 = vweird.f32 %v1274
        %vm1282 = vweird.f32 %v1275
        %vm1283 = vmor %vm1281, %vm1282
        %v1284 = vsel %vm1283, %v1275, %v1280
        %v1285 = vmul.f32 %v1268, %v1284
        %v1287 = vperm.slane %v1255, 0
        %v1289 = vmul.f32 %v1285, %v1287
        %v1291 = vperm.slane %v1256, 0
        %v1293 = vadd.f32 %v1289, %v1291
        %v1294 = vpack.c.bf16 %v1293, %v1293
        %v1295 = vld [vmem:[#allocation8] sm:$0xf]
        %v1296 = vld [vmem:[#allocation8 + $0x4] sm:$0xf]
        %v1297 = vld [vmem:[#allocation8 + $0x8] sm:$0xf]
        %v1298 = vld [vmem:[#allocation8 + $0xc] sm:$0xf]
        %v1299 = vld [vmem:[%s15] sm:$0x1]
        %v1301 = vperm.slane %v1299, 0
        %v1307 = vunpack.c.l.b16 %v1295
        %v1308 = vunpack.c.l.b16 %v1296
        %v1309 = vunpack.c.l.b16 %v1297
        %v1310 = vunpack.c.l.b16 %v1298
        %v1311 = vpack.c.b16 %v1308, %v1307
        %v1312 = vpack.c.b16 %v1310, %v1309
        %v1316 = vsel %vm1236, %v1294, 0
        %1318 = vmatpush.bf16.msra.mxu0 0
        %1319 = vmatpush.bf16.msra.mxu0 0
        %1320 = vmatpush.bf16.msra.mxu0 0
        %1321 = vmatpush.bf16.msra.mxu0 0
        %1322 = vmatpush.bf16.msra.mxu0 0
        %1323 = vmatpush.bf16.msra.mxu0 0
        %1324 = vmatpush.bf16.msra.mxu0 %v1312
        %1325 = vmatpush.bf16.msra.mxu0 %v1311
        %1326 = vmatmul.bf16.gmra.mxu0 %v1316
        %v1327 = vpop.f32.mrf.mxu0
        %v1328 = vadd.f32 %v1301, %v1327
        %v1329 = vpop.f32.mrf.mxu0
        %1330 = vdwg.mxu0
        %v1331 = vmul.f32 %v1328, %v1328
        %v1332 = vmul.f32 %v1328, %v1331
        %v1333 = vmul.f32 %v1332, 0.044715
        %v1334 = vadd.f32 %v1328, %v1333
        %v1335 = vmul.f32 %v1334, 0.7978846
        %v1336 = vtanh.pop %v1335
        %v1337 = vadd.f32 %v1336, 1.0
        %v1338 = vmul.f32 %v1337, 0.5
        %v1339 = vmul.f32 %v1328, %v1338
        %v1340 = vpack.c.bf16 %v1339, %v1339
        %v1341 = vld [vmem:[%s16] sm:$0xf]
        %v1342 = vld [vmem:[%s16 + $0x4] sm:$0xf]
        %v1343 = vld [vmem:[%s16 + $0x8] sm:$0xf]
        %v1344 = vld [vmem:[%s16 + $0xc] sm:$0xf]
        %v1345 = vld [vmem:[%s16 + $0x10] sm:$0xf]
        %v1346 = vld [vmem:[%s16 + $0x14] sm:$0xf]
        %v1347 = vld [vmem:[%s16 + $0x18] sm:$0xf]
        %v1348 = vld [vmem:[%s16 + $0x1c] sm:$0xf]
        %v1349 = vld [vmem:[%s16 + $0x20] sm:$0xf]
        %v1350 = vld [vmem:[%s16 + $0x24] sm:$0xf]
        %v1351 = vld [vmem:[%s16 + $0x28] sm:$0xf]
        %v1352 = vld [vmem:[%s16 + $0x2c] sm:$0xf]
        %v1353 = vld [vmem:[%s16 + $0x30] sm:$0xf]
        %v1354 = vld [vmem:[%s16 + $0x34] sm:$0xf]
        %v1355 = vld [vmem:[%s16 + $0x38] sm:$0xf]
        %v1356 = vld [vmem:[%s16 + $0x3c] sm:$0xf]
        %v1357 = vld [vmem:[%s17] sm:$0x1]
        %v1359 = vperm.slane %v1357, 0
        %v1377 = vunpack.c.l.b16 %v1341
        %v1378 = vunpack.c.l.b16 %v1342
        %v1379 = vunpack.c.l.b16 %v1343
        %v1380 = vunpack.c.l.b16 %v1344
        %v1381 = vunpack.c.l.b16 %v1345
        %v1382 = vunpack.c.l.b16 %v1346
        %v1383 = vunpack.c.l.b16 %v1347
        %v1384 = vunpack.c.l.b16 %v1348
        %v1385 = vunpack.c.l.b16 %v1349
        %v1386 = vunpack.c.l.b16 %v1350
        %v1387 = vunpack.c.l.b16 %v1351
        %v1388 = vunpack.c.l.b16 %v1352
        %v1389 = vunpack.c.l.b16 %v1353
        %v1390 = vunpack.c.l.b16 %v1354
        %v1391 = vunpack.c.l.b16 %v1355
        %v1392 = vunpack.c.l.b16 %v1356
        %v1393 = vpack.c.b16 %v1378, %v1377
        %v1394 = vpack.c.b16 %v1380, %v1379
        %v1395 = vpack.c.b16 %v1382, %v1381
        %v1396 = vpack.c.b16 %v1384, %v1383
        %v1397 = vpack.c.b16 %v1386, %v1385
        %v1398 = vpack.c.b16 %v1388, %v1387
        %v1399 = vpack.c.b16 %v1390, %v1389
        %v1400 = vpack.c.b16 %v1392, %v1391
        %1409 = vmatpush.bf16.msra.mxu0 %v1400
        %1410 = vmatpush.bf16.msra.mxu0 %v1399
        %1411 = vmatpush.bf16.msra.mxu0 %v1398
        %1412 = vmatpush.bf16.msra.mxu0 %v1397
        %1413 = vmatpush.bf16.msra.mxu0 %v1396
        %1414 = vmatpush.bf16.msra.mxu0 %v1395
        %1415 = vmatpush.bf16.msra.mxu0 %v1394
        %1416 = vmatpush.bf16.msra.mxu0 %v1393
        %1417 = vmatmul.bf16.gmra.mxu0 %v1340
        %v1418 = vpop.f32.mrf.mxu0
        %v1419 = vadd.f32 %v1359, %v1418
        %v1420 = vpop.f32.mrf.mxu0
        %1421 = vdwg.mxu0
        %v1422 = vadd.f32 %v1254, %v1419
        %1423 = vst.msk [vmem:[%s635] sm:$0xff] %vm1236, %v1422
        %s1424 = sand.u32 %s446, 1
        %s1425 = scalar_lea.sflag [#allocation7], %s1424
        %s1426 = sand.u32 %s446, 1
        %s1427 = smul.addr %s1426, 8
        %s1428 = scalar_lea.vmem [#allocation10], %s1427
        // Predicated region
        $region112: #{tpu_custom_call.1} parent=91 // pred_check
          %p1429 = pneg %p456
        $region113: #{tpu_custom_call.1} parent=91 // pred_check_branch
          %1431 = sbr.rel (%p1429) target = $region115
        $region114: #{tpu_custom_call.1} parent=91 // pred_region
          %1433 = vsyncadd %s1425, 0
          %s1434 = sadd.s32 %s39, %s38
          %s1435 = smul.addr %s1434, 8
          %s1436 = scalar_lea.hbm %s18, %s1435
          %s1438 = sshll.u32 %s1428, 4
          %s1439 = int_to_ptr.vmem [resolvable:$true] %s1438
          %s1440 = sshll.u32 %s1436, 4
          %s1441 = int_to_ptr.hbm [resolvable:$true] %s1440
          %1443 = dma.vmem_to_hbm [thread:$0]  %s1439, 128, %s1441, %s1425
        $region115: #{tpu_custom_call.1} parent=91 // pred_fallthru
          _
      $region92: #{tpu_custom_call.1} parent=5 // pred_fallthru
        _
      %p1444 = scmp.le.s32.totalorder 2, %s29
      // Predicated region
      $region116: #{tpu_custom_call.1} parent=5 // pred_check
        %p1445 = pneg %p1444
      $region117: #{tpu_custom_call.1} parent=5 // pred_check_branch
        %1447 = sbr.rel (%p1445) target = $region119
      $region118: #{tpu_custom_call.1} parent=5 // pred_region
        %s1448 = ssub.s32 %s29, 2
        // Predicated region
        $region120: #{tpu_custom_call.1} parent=118 // pred_check
          %p1449 = pneg %p462
        $region121: #{tpu_custom_call.1} parent=118 // pred_check_branch
          %1451 = sbr.rel (%p1449) target = $region123
        $region122: #{tpu_custom_call.1} parent=118 // pred_region
          %s1452 = sand.u32 %s447, 1
          %s1453 = scalar_lea.sflag [#allocation7], %s1452
          %s1454 = sand.u32 %s447, 1
          %s1455 = smul.addr %s1454, 8
          %s1456 = scalar_lea.vmem [#allocation10], %s1455
          %1458 = dma.done %s1453, 128
        $region123: #{tpu_custom_call.1} parent=118 // pred_fallthru
          _
      $region119: #{tpu_custom_call.1} parent=5 // pred_fallthru
        _
    $region6: #{tpu_custom_call.1} parent=1 // loop_footer
      %s33 = sadd.s32 1, %s29
    $region7: #{tpu_custom_call.1} parent=1 // loop_footer_branch
      %28 = sbr.rel target = $region3
    $region8: #{tpu_custom_call.1} parent=1 // loop_exit
      _
    %1459 = vsyncpa [#allocation6], 1
    %s1460 = scalar_lea.sflag [#allocation6], 1
    %1461 = vsyncpa %s1460, 1
    %1462 = vsyncpa [#allocation9], 1
    %1463 = vsyncpa [#allocation7], 1
    %s1464 = scalar_lea.sflag [#allocation7], 1
    %1465 = vsyncpa %s1464, 1

</llo_original>
